<compile_context>
chip_gen: v7x
topology: tpu7x:2x2x1
jax: 0.10.0
libtpu: 0.0.40
codegen_flags: <defaults>
</compile_context>

<pallas_src>
import jax
import jax.numpy as jnp
from jax.experimental import pallas as pl
from jax.experimental.pallas import tpu as pltpu

LN_EPS = 1e-5  # PyTorch nn.LayerNorm default

# column indices inside the packed parameter slab of the edge kernel
C_LRB1, C_LRG, C_LRBE, C_LRB2 = 0, 1, 2, 3
C_IB1, C_IG, C_IBE, C_IW2, C_IB2 = 4, 5, 6, 7, 8
C_GB1, C_GG, C_GBE, C_GW2, C_GB2 = 9, 10, 11, 12, 13

# column indices inside the packed parameter slab of the finalize kernel
C_PB1, C_PG, C_PBE, C_PW2, C_PB2, C_PW1N = 0, 1, 2, 3, 4, 5


def _ln0(x):
    """LayerNorm statistics over the feature (sublane) axis."""
    mu = jnp.mean(x, axis=0, keepdims=True)
    var = jnp.mean((x - mu) ** 2, axis=0, keepdims=True)
    return (x - mu) * jax.lax.rsqrt(var + LN_EPS)


# ----------------------------------------------------------------------------
# kernel 1: edge streaming, per-split partial delta_pos accumulation
# ----------------------------------------------------------------------------
def pos_update_edge_kernel(hlr_ref, he_ref, bx_ref, rv_ref, dist_ref, el_ref,
                           w1bd_ref, w2bd_ref, wf_ref, iw1_ref, slab_ref,
                           part_ref):
    k = pl.program_id(1)

    @pl.when(k == 0)
    def _init():
        part_ref[...] = jnp.zeros_like(part_ref)

    h2, d2 = w1bd_ref.shape          # (2H, 2D)
    d = d2 // 2                      # node_dim (= inter_dim)
    gh = wf_ref.shape[0] - d         # gate hidden width (32)

    slab = slab_ref[...]
    col = lambda c, rows: slab[:rows, c:c + 1]

    # ---- left/right node->edge MLPs, block-diagonal packed ----
    h1 = jnp.dot(w1bd_ref[...], hlr_ref[...],
                 preferred_element_type=jnp.float32) + col(C_LRB1, h2)   # [2H, TE]
    h1 = jnp.concatenate([_ln0(h1[: h2 // 2]), _ln0(h1[h2 // 2:])], axis=0)
    h1 = jnp.maximum(h1 * col(C_LRG, h2) + col(C_LRBE, h2), 0.0)
    lr = jnp.dot(w2bd_ref[...], h1,
                 preferred_element_type=jnp.float32) + col(C_LRB2, d2)   # [2D, TE]

    # ---- fused bond/node linears + gate first layer: one MXU push ----
    fin = jnp.concatenate([he_ref[...], lr, bx_ref[...]], axis=0)        # [De+2D+Gp, TE]
    proj = jnp.dot(wf_ref[...], fin, preferred_element_type=jnp.float32)  # [D+32, TE]

    # inter_module MLP ([*,1] head on the VPU: mul + sublane reduce)
    ih = jnp.dot(iw1_ref[...], proj[:d],
                 preferred_element_type=jnp.float32) + col(C_IB1, d)
    ih = jnp.maximum(_ln0(ih) * col(C_IG, d) + col(C_IBE, d), 0.0)
    inter = jnp.sum(ih * col(C_IW2, d), axis=0, keepdims=True) + col(C_IB2, 1)

    # gate MLP ([*,1] head on the VPU)
    gate_h = proj[d:] + col(C_GB1, gh)
    gate_h = jnp.maximum(_ln0(gate_h) * col(C_GG, gh) + col(C_GBE, gh), 0.0)
    gate = jnp.sum(gate_h * col(C_GW2, gh), axis=0, keepdims=True) + col(C_GB2, 1)

    weight_edge = inter * jax.nn.sigmoid(gate)                            # [1, TE]

    # force = w * rel_vec * 5 / ((d + 1e-6) * (d + 5))   (exact divide)
    dist = dist_ref[...]
    coef = 5.0 / ((dist + 1e-6) * (dist + 5.0))                           # [1, TE]
    force = rv_ref[...] * (weight_edge * coef)                            # [3, TE]

    # scatter_sum(force, edge_index_left) as a lane-dense MXU matmul:
    #   partial[3, N_pad] += force[3, TE] @ onehot[TE, N_pad]
    te = he_ref.shape[1]
    n_pad = part_ref.shape[1]
    iota = jax.lax.broadcasted_iota(jnp.int32, (te, n_pad), 1)
    onehot = (iota == el_ref[...]).astype(jnp.float32)                    # [TE, N_pad]
    part_ref[...] += jnp.dot(force, onehot, preferred_element_type=jnp.float32)


# ----------------------------------------------------------------------------
# kernel 2: sum per-split partials + pos_scale_net + scale
# ----------------------------------------------------------------------------
def pos_update_finalize_kernel(part_ref, hn_ref, nx_ref, pw1h_ref, pw1x_ref,
                               slab_ref, out_ref):
    nsplit = part_ref.shape[0]
    delta = part_ref[0]
    for c in range(1, nsplit):               # static, tiny (num_splits)
        delta = delta + part_ref[c]                                      # [3, N_pad]

    hdim = pw1h_ref.shape[0]
    slab = slab_ref[...]
    col = lambda c, rows: slab[:rows, c:c + 1]

    norm = jnp.sqrt(jnp.sum(delta * delta, axis=0, keepdims=True))       # [1, N_pad]
    ph = (jnp.dot(pw1h_ref[...], hn_ref[...], preferred_element_type=jnp.float32)
          + jnp.dot(pw1x_ref[...], nx_ref[...], preferred_element_type=jnp.float32)
          + col(C_PW1N, hdim) * norm            # K=1 term as an outer product (VPU)
          + col(C_PB1, hdim))                                            # [H, N_pad]
    ph = jnp.maximum(_ln0(ph) * col(C_PG, hdim) + col(C_PBE, hdim), 0.0)
    scale = jax.nn.sigmoid(
        jnp.sum(ph * col(C_PW2, hdim), axis=0, keepdims=True) + col(C_PB2, 1))
    out_ref[...] = delta * scale                                          # [3, N_pad]


# ----------------------------------------------------------------------------
# parameter repacking (transpose / block-diag / fuse / slab) — one-off glue
# ----------------------------------------------------------------------------
def _prep_params(p, g_pad):
    f32 = lambda a: jnp.asarray(a, jnp.float32)
    T = lambda w: f32(w).T
    row = lambda b: f32(b).reshape(-1)

    D, H = p["lw1"].shape
    De = p["wb"].shape[0]
    G = p["gw1_x"].shape[0]
    GH = p["gw1_e"].shape[1]

    def blkdiag(a, b):
        za = jnp.zeros((a.shape[0], b.shape[1]), jnp.float32)
        zb = jnp.zeros((b.shape[0], a.shape[1]), jnp.float32)
        return jnp.concatenate(
            [jnp.concatenate([a, za], axis=1),
             jnp.concatenate([zb, b], axis=1)], axis=0)

    def slab(cols, rows):
        packed = [jnp.pad(row(c), (0, rows - row(c).shape[0])) for c in cols]
        return jnp.stack(packed, axis=1)

    w1_bd = blkdiag(T(p["lw1"]), T(p["rw1"]))      # [2H, 2D]
    w2_bd = blkdiag(T(p["lw2"]), T(p["rw2"]))      # [2D, 2H]

    gx = jnp.pad(T(p["gw1_x"]), ((0, 0), (0, g_pad - G)))
    w_fused = jnp.concatenate([
        jnp.concatenate([T(p["wb"]), T(p["wn_l"]), T(p["wn_r"]),
                         jnp.zeros((D, g_pad), jnp.float32)], axis=1),
        jnp.concatenate([T(p["gw1_e"]), T(p["gw1_l"]), T(p["gw1_r"]), gx], axis=1),
    ], axis=0)                                      # [D+GH, De+2D+g_pad]

    r1 = max(2 * H, 2 * D, D, GH)
    slab1 = slab([
        jnp.concatenate([row(p["lb1"]), row(p["rb1"])]),
        jnp.concatenate([row(p["lg"]), row(p["rg"])]),
        jnp.concatenate([row(p["lbe"]), row(p["rbe"])]),
        jnp.concatenate([row(p["lb2"]), row(p["rb2"])]),
        p["ib1"], p["ig"], p["ibe"], p["iw2"], p["ib2"],
        p["gb1"], p["gg"], p["gbe"], p["gw2"], p["gb2"],
    ], r1)

    slab2 = slab([p["pb1"], p["pg"], p["pbe"], p["pw2"], p["pb2"], p["pw1_n"]], H)

    return dict(w1_bd=w1_bd, w2_bd=w2_bd, w_fused=w_fused, iw1t=T(p["iw1"]),
                slab1=slab1, pw1h_t=T(p["pw1_h"]), pw1x_t=T(p["pw1_x"]),
                slab2=slab2)


# ----------------------------------------------------------------------------
# wrapper: gathers / transposes / padding (glue) + the two pallas_calls
# ----------------------------------------------------------------------------
def pos_update(h_node, h_edge, edge_index, relative_vec, distance, node_extra,
               params, *, edge_tile=1024, num_splits=2):
    N, D = h_node.shape
    E, De = h_edge.shape
    G = node_extra.shape[1]
    G_pad = max(8, -(-G // 8) * 8)
    N_pad = -(-N // 128) * 128          # lane-dense node axis

    e_left = edge_index[0].astype(jnp.int32)
    e_right = edge_index[1].astype(jnp.int32)

    # --- edge tile: big (amortize per-step overhead) but capped by problem
    #     size and a VMEM heuristic that is safe on v7x (64 MiB physical).
    edge_tile = max(128, (edge_tile // 128) * 128)
    per_split = -(-E // num_splits)
    edge_tile = min(edge_tile, -(-per_split // 128) * 128)
    bytes_per_edge = 4 * (2 * (2 * D + De + G_pad + 5) + N_pad + 8 * (2 * D + 64))
    vmem_cap = max(128, (24 * 1024 * 1024 // bytes_per_edge) // 128 * 128)
    edge_tile = min(edge_tile, vmem_cap)

    chunk = num_splits * edge_tile
    E_pad = -(-E // chunk) * chunk
    nk = E_pad // chunk                 # edge tiles per split

    # --- glue: gathers + transpose (features on sublanes, edges on lanes)
    hlrT = jnp.concatenate([h_node[e_left], h_node[e_right]], axis=-1).T
    hlrT = hlrT.astype(jnp.float32)                                  # [2D, E]
    h_edgeT = h_edge.T.astype(jnp.float32)                           # [De, E]
    bxT = jnp.pad(node_extra[e_left].T.astype(jnp.float32),
                  ((0, G_pad - G), (0, 0)))                          # [G_pad, E]
    rel_vecT = relative_vec.T.astype(jnp.float32)                    # [3, E]
    distT = distance[None, :].astype(jnp.float32)                    # [1, E]

    pad = E_pad - E
    if pad:
        zp = lambda a: jnp.pad(a, ((0, 0), (0, pad)))
        hlrT, h_edgeT, bxT, rel_vecT = zp(hlrT), zp(h_edgeT), zp(bxT), zp(rel_vecT)
        # padded edges: rel_vec == 0 -> force == 0; dist = 1 keeps divide finite
        distT = jnp.pad(distT, ((0, 0), (0, pad)), constant_values=1.0)
        e_left = jnp.pad(e_left, (0, pad))
    eleft_col = e_left[:, None]                                      # [E_pad, 1]

    npad = N_pad - N
    h_nodeT = jnp.pad(h_node.T.astype(jnp.float32), ((0, 0), (0, npad)))
    node_extraT = jnp.pad(node_extra.T.astype(jnp.float32), ((0, 0), (0, npad)))

    kp = _prep_params(params, G_pad)

    def estream(rows):
        return pl.BlockSpec((rows, edge_tile), lambda c, k: (0, c * nk + k))

    def resident(a):
        return pl.BlockSpec(a.shape, lambda c, k: (0, 0))

    partial = pl.pallas_call(
        pos_update_edge_kernel,
        out_shape=jax.ShapeDtypeStruct((num_splits, 3, N_pad), jnp.float32),
        grid=(num_splits, nk),
        in_specs=[estream(2 * D), estream(De), estream(G_pad), estream(3),
                  estream(1),
                  pl.BlockSpec((edge_tile, 1), lambda c, k: (c * nk + k, 0)),
                  resident(kp["w1_bd"]), resident(kp["w2_bd"]),
                  resident(kp["w_fused"]), resident(kp["iw1t"]),
                  resident(kp["slab1"])],
        out_specs=pl.BlockSpec((None, 3, N_pad), lambda c, k: (c, 0, 0)),
        compiler_params=pltpu.CompilerParams(
            dimension_semantics=("parallel", "arbitrary"),
            vmem_limit_bytes=48 * 1024 * 1024),
    )(hlrT, h_edgeT, bxT, rel_vecT, distT, eleft_col,
      kp["w1_bd"], kp["w2_bd"], kp["w_fused"], kp["iw1t"], kp["slab1"])

    # --- finalize: sum partials, pos_scale_net, scale (one-shot, tiny)
    def full(a):
        return pl.BlockSpec(a.shape, lambda i: (0,) * a.ndim)

    out_T = pl.pallas_call(
        pos_update_finalize_kernel,
        out_shape=jax.ShapeDtypeStruct((3, N_pad), jnp.float32),
        grid=(1,),
        in_specs=[full(partial), full(h_nodeT), full(node_extraT),
                  full(kp["pw1h_t"]), full(kp["pw1x_t"]), full(kp["slab2"])],
        out_specs=pl.BlockSpec((3, N_pad), lambda i: (0, 0)),
        compiler_params=pltpu.CompilerParams(
            dimension_semantics=("arbitrary",)),
    )(partial, h_nodeT, node_extraT, kp["pw1h_t"], kp["pw1x_t"], kp["slab2"])

    return out_T[:, :N].T                                            # [N, 3]


# ----------------------------------------------------------------------------
# parameters (natural PyTorch layout) + pure-JAX reference
# ----------------------------------------------------------------------------
def init_params(key, node_dim, edge_dim, hidden_dim, gate_dim):
    D, De, H, G = node_dim, edge_dim, hidden_dim, gate_dim
    keys = iter(jax.random.split(key, 64))

    def w(i, o, scale=0.1):
        return jax.random.normal(next(keys), (i, o), jnp.float32) * scale

    def b(o, scale=0.1):
        return jax.random.normal(next(keys), (1, o), jnp.float32) * scale

    ones = lambda o: jnp.ones((1, o), jnp.float32)
    zeros = lambda o: jnp.zeros((1, o), jnp.float32)

    p = {}
    p.update(lw1=w(D, H), lb1=b(H), lg=ones(H), lbe=zeros(H), lw2=w(H, D), lb2=b(D))
    p.update(rw1=w(D, H), rb1=b(H), rg=ones(H), rbe=zeros(H), rw2=w(H, D), rb2=b(D))
    p.update(wb=w(De, D), wn_l=w(D, D), wn_r=w(D, D))
    p.update(iw1=w(D, D), ib1=b(D), ig=ones(D), ibe=zeros(D), iw2=w(D, 1), ib2=b(1))
    p.update(gw1_e=w(De, 32), gw1_l=w(D, 32), gw1_r=w(D, 32), gw1_x=w(G, 32),
             gb1=b(32), gg=ones(32), gbe=zeros(32), gw2=w(32, 1), gb2=b(1))
    p.update(pw1_h=w(D, H), pw1_x=w(G, H), pw1_n=w(1, H),
             pb1=b(H), pg=ones(H), pbe=zeros(H), pw2=w(H, 1), pb2=b(1))
    return p


def _ln_relu(h, g, be):
    mu = jnp.mean(h, axis=-1, keepdims=True)
    var = jnp.mean((h - mu) ** 2, axis=-1, keepdims=True)
    return jnp.maximum((h - mu) * jax.lax.rsqrt(var + LN_EPS) * g + be, 0.0)


def _mlp2(x, w1, b1, g, be, w2, b2):
    h = jnp.dot(x, w1, preferred_element_type=jnp.float32) + b1
    h = _ln_relu(h, g, be)
    return jnp.dot(h, w2, preferred_element_type=jnp.float32) + b2


def ref_forward(h_node, h_edge, edge_index, relative_vec, distance, node_extra, p):
    """Pure-JAX reference mirroring the PyTorch module exactly."""
    el, er = edge_index[0], edge_index[1]
    left = _mlp2(h_node[el], p["lw1"], p["lb1"], p["lg"], p["lbe"], p["lw2"], p["lb2"])
    right = _mlp2(h_node[er], p["rw1"], p["rb1"], p["rg"], p["rbe"], p["rw2"], p["rb2"])
    node_cat = jnp.concatenate([left, right], axis=-1)
    bond = h_edge @ p["wb"]
    nodef = node_cat @ jnp.concatenate([p["wn_l"], p["wn_r"]], axis=0)
    inter = _mlp2(bond + nodef, p["iw1"], p["ib1"], p["ig"], p["ibe"], p["iw2"], p["ib2"])
    gate_in = jnp.concatenate([h_edge, node_cat, node_extra[el]], axis=-1)
    gw1 = jnp.concatenate([p["gw1_e"], p["gw1_l"], p["gw1_r"], p["gw1_x"]], axis=0)
    gate = _mlp2(gate_in, gw1, p["gb1"], p["gg"], p["gbe"], p["gw2"], p["gb2"])
    weight_edge = inter * jax.nn.sigmoid(gate)
    d = distance[:, None]
    force = weight_edge * relative_vec / (d + 1e-6) / (d + 5.0) * 5.0
    delta = jnp.zeros((h_node.shape[0], 3), jnp.float32).at[el].add(force)
    norm = jnp.linalg.norm(delta, axis=-1, keepdims=True)
    pin = jnp.concatenate([h_node, node_extra, norm], axis=-1)
    pw1 = jnp.concatenate([p["pw1_h"], p["pw1_x"], p["pw1_n"]], axis=0)
    scale = jax.nn.sigmoid(
        _mlp2(pin, pw1, p["pb1"], p["pg"], p["pbe"], p["pw2"], p["pb2"]))
    return delta * scale


if __name__ == "__main__":
    node_dim, edge_dim, hidden_dim, gate_dim = 32, 16, 32, 2
    n_nodes, n_edges = 16, 300

    key = jax.random.PRNGKey(0)
    k = jax.random.split(key, 8)
    h_node = jax.random.normal(k[0], (n_nodes, node_dim), jnp.float32)
    h_edge = jax.random.normal(k[1], (n_edges, edge_dim), jnp.float32)
    edge_index = jax.random.randint(k[2], (2, n_edges), 0, n_nodes)
    relative_vec = jax.random.normal(k[3], (n_edges, 3), jnp.float32)
    distance = jnp.abs(jax.random.normal(k[4], (n_edges,), jnp.float32)) + 0.5
    node_extra = jax.random.normal(k[5], (n_nodes, gate_dim), jnp.float32)

    params = init_params(k[6], node_dim, edge_dim, hidden_dim, gate_dim)

    out = pos_update(h_node, h_edge, edge_index, relative_vec, distance,
                     node_extra, params)
    out = jax.block_until_ready(out)

    ref = ref_forward(h_node, h_edge, edge_index, relative_vec, distance,
                      node_extra, params)
    assert out.shape == (n_nodes, 3)
    err = float(jnp.max(jnp.abs(out - ref)))
    assert jnp.allclose(out, ref, atol=2e-3, rtol=2e-3), err

    print("KERNEL_OK")
</pallas_src>

<mosaic_0001>
module attributes {stable_mosaic.version = 11 : i64} {
  func.func @pos_update_edge_kernel(%arg0: i32, %arg1: i32, %arg2: memref<64x256xf32, #tpu.memory_space<vmem>>, %arg3: memref<16x256xf32, #tpu.memory_space<vmem>>, %arg4: memref<8x256xf32, #tpu.memory_space<vmem>>, %arg5: memref<3x256xf32, #tpu.memory_space<vmem>>, %arg6: memref<1x256xf32, #tpu.memory_space<vmem>>, %arg7: memref<256x1xi32, #tpu.memory_space<vmem>>, %arg8: memref<64x64xf32, #tpu.memory_space<vmem>>, %arg9: memref<64x64xf32, #tpu.memory_space<vmem>>, %arg10: memref<64x88xf32, #tpu.memory_space<vmem>>, %arg11: memref<32x32xf32, #tpu.memory_space<vmem>>, %arg12: memref<64x14xf32, #tpu.memory_space<vmem>>, %arg13: memref<1x3x128xf32, #tpu.memory_space<vmem>>) attributes {dimension_semantics = [#tpu.dimension_semantics<parallel>, #tpu.dimension_semantics<arbitrary>], iteration_bounds = array<i64: 2, 1>, scalar_prefetch = 0 : i64, scratch_operands = 0 : i64, tpu.core_type = #tpu.core_type<tc>, window_params = [{transform_indices = @transform_0, window_bounds = array<i64: 64, 256>}, {transform_indices = @transform_1, window_bounds = array<i64: 16, 256>}, {transform_indices = @transform_2, window_bounds = array<i64: 8, 256>}, {transform_indices = @transform_3, window_bounds = array<i64: 3, 256>}, {transform_indices = @transform_4, window_bounds = array<i64: 1, 256>}, {transform_indices = @transform_5, window_bounds = array<i64: 256, 1>}, {pipeline_mode = #tpu.pipeline_mode<synchronous>, transform_indices = @transform_6, window_bounds = array<i64: 64, 64>}, {pipeline_mode = #tpu.pipeline_mode<synchronous>, transform_indices = @transform_7, window_bounds = array<i64: 64, 64>}, {pipeline_mode = #tpu.pipeline_mode<synchronous>, transform_indices = @transform_8, window_bounds = array<i64: 64, 88>}, {pipeline_mode = #tpu.pipeline_mode<synchronous>, transform_indices = @transform_9, window_bounds = array<i64: 32, 32>}, {pipeline_mode = #tpu.pipeline_mode<synchronous>, transform_indices = @transform_10, window_bounds = array<i64: 64, 14>}, {transform_indices = @transform_11, window_bounds = array<i64: 1, 3, 128>}]} {
    %c0_i32 = arith.constant 0 : i32
    %0 = arith.cmpi eq, %arg1, %c0_i32 : i32
    %1 = arith.extui %0 : i1 to i32
    %c0_i32_0 = arith.constant 0 : i32
    %2 = arith.cmpi ne, %1, %c0_i32_0 : i32
    scf.if %2 {
      %cst_61 = arith.constant 0.000000e+00 : f32
      %176 = vector.broadcast %cst_61 : f32 to vector<3x128xf32>
      %c0_62 = arith.constant 0 : index
      %c0_63 = arith.constant 0 : index
      %c0_64 = arith.constant 0 : index
      %177 = vector.load %arg13[%c0_62, %c0_63, %c0_64] : memref<1x3x128xf32, #tpu.memory_space<vmem>>, vector<1x3x128xf32>
      %178 = vector.shape_cast %177 : vector<1x3x128xf32> to vector<3x128xf32>
      %179 = vector.shape_cast %176 : vector<3x128xf32> to vector<1x3x128xf32>
      tpu.vector_store %arg13[%c0_62, %c0_63, %c0_64], %179 {strides = array<i32>} : memref<1x3x128xf32, #tpu.memory_space<vmem>>, vector<1x3x128xf32>,
    } else {
    }
    %c0 = arith.constant 0 : index
    %c0_1 = arith.constant 0 : index
    %3 = vector.load %arg12[%c0, %c0_1] : memref<64x14xf32, #tpu.memory_space<vmem>>, vector<64x14xf32>
    %c0_2 = arith.constant 0 : index
    %c0_3 = arith.constant 0 : index
    %4 = vector.load %arg8[%c0_2, %c0_3] : memref<64x64xf32, #tpu.memory_space<vmem>>, vector<64x64xf32>
    %c0_4 = arith.constant 0 : index
    %c0_5 = arith.constant 0 : index
    %5 = vector.load %arg2[%c0_4, %c0_5] : memref<64x256xf32, #tpu.memory_space<vmem>>, vector<64x256xf32>
    %cst = arith.constant dense<0.000000e+00> : vector<64x256xf32>
    %6 = tpu.matmul %4, %5, %cst {dimension_numbers = #tpu.dot_dimension_numbers<[1], [0], [0], [1], [0, 0, 1, 1], [], []>} : vector<64x64xf32>, vector<64x256xf32>, vector<64x256xf32> -> vector<64x256xf32>
    %7 = vector.extract_strided_slice %3 {offsets = [0, 0], sizes = [64, 1], strides = [1, 1]} : vector<64x14xf32> to vector<64x1xf32>
    %8 = vector.broadcast %7 : vector<64x1xf32> to vector<64x256xf32>
    %9 = arith.addf %6, %8 : vector<64x256xf32>
    %10 = vector.extract_strided_slice %9 {offsets = [0, 0], sizes = [32, 256], strides = [1, 1]} : vector<64x256xf32> to vector<32x256xf32>
    %cst_6 = arith.constant dense<0.000000e+00> : vector<256xf32>
    %11 = vector.multi_reduction <add>, %10, %cst_6 [0] : vector<32x256xf32> to vector<256xf32>
    %12 = vector.shape_cast %11 : vector<256xf32> to vector<1x256xf32>
    %cst_7 = arith.constant 3.200000e+01 : f32
    %13 = vector.broadcast %cst_7 : f32 to vector<1x256xf32>
    %14 = arith.divf %12, %13 : vector<1x256xf32>
    %15 = vector.broadcast %14 : vector<1x256xf32> to vector<32x256xf32>
    %16 = arith.subf %10, %15 : vector<32x256xf32>
    %17 = arith.mulf %16, %16 : vector<32x256xf32>
    %cst_8 = arith.constant dense<0.000000e+00> : vector<256xf32>
    %18 = vector.multi_reduction <add>, %17, %cst_8 [0] : vector<32x256xf32> to vector<256xf32>
    %19 = vector.shape_cast %18 : vector<256xf32> to vector<1x256xf32>
    %cst_9 = arith.constant 3.200000e+01 : f32
    %20 = vector.broadcast %cst_9 : f32 to vector<1x256xf32>
    %21 = arith.divf %19, %20 : vector<1x256xf32>
    %22 = vector.broadcast %14 : vector<1x256xf32> to vector<32x256xf32>
    %23 = arith.subf %10, %22 : vector<32x256xf32>
    %cst_10 = arith.constant 9.99999974E-6 : f32
    %24 = vector.broadcast %cst_10 : f32 to vector<1x256xf32>
    %25 = arith.addf %21, %24 : vector<1x256xf32>
    %26 = math.rsqrt %25 : vector<1x256xf32>
    %27 = vector.broadcast %26 : vector<1x256xf32> to vector<32x256xf32>
    %28 = arith.mulf %23, %27 : vector<32x256xf32>
    %29 = vector.extract_strided_slice %9 {offsets = [32, 0], sizes = [32, 256], strides = [1, 1]} : vector<64x256xf32> to vector<32x256xf32>
    %cst_11 = arith.constant dense<0.000000e+00> : vector<256xf32>
    %30 = vector.multi_reduction <add>, %29, %cst_11 [0] : vector<32x256xf32> to vector<256xf32>
    %31 = vector.shape_cast %30 : vector<256xf32> to vector<1x256xf32>
    %cst_12 = arith.constant 3.200000e+01 : f32
    %32 = vector.broadcast %cst_12 : f32 to vector<1x256xf32>
    %33 = arith.divf %31, %32 : vector<1x256xf32>
    %34 = vector.broadcast %33 : vector<1x256xf32> to vector<32x256xf32>
    %35 = arith.subf %29, %34 : vector<32x256xf32>
    %36 = arith.mulf %35, %35 : vector<32x256xf32>
    %cst_13 = arith.constant dense<0.000000e+00> : vector<256xf32>
    %37 = vector.multi_reduction <add>, %36, %cst_13 [0] : vector<32x256xf32> to vector<256xf32>
    %38 = vector.shape_cast %37 : vector<256xf32> to vector<1x256xf32>
    %cst_14 = arith.constant 3.200000e+01 : f32
    %39 = vector.broadcast %cst_14 : f32 to vector<1x256xf32>
    %40 = arith.divf %38, %39 : vector<1x256xf32>
    %41 = vector.broadcast %33 : vector<1x256xf32> to vector<32x256xf32>
    %42 = arith.subf %29, %41 : vector<32x256xf32>
    %cst_15 = arith.constant 9.99999974E-6 : f32
    %43 = vector.broadcast %cst_15 : f32 to vector<1x256xf32>
    %44 = arith.addf %40, %43 : vector<1x256xf32>
    %45 = math.rsqrt %44 : vector<1x256xf32>
    %46 = vector.broadcast %45 : vector<1x256xf32> to vector<32x256xf32>
    %47 = arith.mulf %42, %46 : vector<32x256xf32>
    %48 = tpu.concatenate %28, %47 in 0 : vector<32x256xf32>, vector<32x256xf32> -> vector<64x256xf32>
    %49 = vector.extract_strided_slice %3 {offsets = [0, 1], sizes = [64, 1], strides = [1, 1]} : vector<64x14xf32> to vector<64x1xf32>
    %50 = vector.broadcast %49 : vector<64x1xf32> to vector<64x256xf32>
    %51 = arith.mulf %48, %50 : vector<64x256xf32>
    %52 = vector.extract_strided_slice %3 {offsets = [0, 2], sizes = [64, 1], strides = [1, 1]} : vector<64x14xf32> to vector<64x1xf32>
    %53 = vector.broadcast %52 : vector<64x1xf32> to vector<64x256xf32>
    %54 = arith.addf %51, %53 : vector<64x256xf32>
    %cst_16 = arith.constant 0.000000e+00 : f32
    %55 = vector.broadcast %cst_16 : f32 to vector<64x256xf32>
    %56 = arith.maximumf %54, %55 : vector<64x256xf32>
    %c0_17 = arith.constant 0 : index
    %c0_18 = arith.constant 0 : index
    %57 = vector.load %arg9[%c0_17, %c0_18] : memref<64x64xf32, #tpu.memory_space<vmem>>, vector<64x64xf32>
    %cst_19 = arith.constant dense<0.000000e+00> : vector<64x256xf32>
    %58 = tpu.matmul %57, %56, %cst_19 {dimension_numbers = #tpu.dot_dimension_numbers<[1], [0], [0], [1], [0, 0, 1, 1], [], []>} : vector<64x64xf32>, vector<64x256xf32>, vector<64x256xf32> -> vector<64x256xf32>
    %59 = vector.extract_strided_slice %3 {offsets = [0, 3], sizes = [64, 1], strides = [1, 1]} : vector<64x14xf32> to vector<64x1xf32>
    %60 = vector.broadcast %59 : vector<64x1xf32> to vector<64x256xf32>
    %61 = arith.addf %58, %60 : vector<64x256xf32>
    %c0_20 = arith.constant 0 : index
    %c0_21 = arith.constant 0 : index
    %62 = vector.load %arg3[%c0_20, %c0_21] : memref<16x256xf32, #tpu.memory_space<vmem>>, vector<16x256xf32>
    %c0_22 = arith.constant 0 : index
    %c0_23 = arith.constant 0 : index
    %63 = vector.load %arg4[%c0_22, %c0_23] : memref<8x256xf32, #tpu.memory_space<vmem>>, vector<8x256xf32>
    %64 = tpu.concatenate %62, %61, %63 in 0 : vector<16x256xf32>, vector<64x256xf32>, vector<8x256xf32> -> vector<88x256xf32>
    %c0_24 = arith.constant 0 : index
    %c0_25 = arith.constant 0 : index
    %65 = vector.load %arg10[%c0_24, %c0_25] : memref<64x88xf32, #tpu.memory_space<vmem>>, vector<64x88xf32>
    %cst_26 = arith.constant dense<0.000000e+00> : vector<64x256xf32>
    %66 = tpu.matmul %65, %64, %cst_26 {dimension_numbers = #tpu.dot_dimension_numbers<[1], [0], [0], [1], [0, 0, 1, 1], [], []>} : vector<64x88xf32>, vector<88x256xf32>, vector<64x256xf32> -> vector<64x256xf32>
    %c0_27 = arith.constant 0 : index
    %c0_28 = arith.constant 0 : index
    %67 = vector.load %arg11[%c0_27, %c0_28] : memref<32x32xf32, #tpu.memory_space<vmem>>, vector<32x32xf32>
    %68 = vector.extract_strided_slice %66 {offsets = [0, 0], sizes = [32, 256], strides = [1, 1]} : vector<64x256xf32> to vector<32x256xf32>
    %cst_29 = arith.constant dense<0.000000e+00> : vector<32x256xf32>
    %69 = tpu.matmul %67, %68, %cst_29 {dimension_numbers = #tpu.dot_dimension_numbers<[1], [0], [0], [1], [0, 0, 1, 1], [], []>} : vector<32x32xf32>, vector<32x256xf32>, vector<32x256xf32> -> vector<32x256xf32>
    %70 = vector.extract_strided_slice %3 {offsets = [0, 4], sizes = [32, 1], strides = [1, 1]} : vector<64x14xf32> to vector<32x1xf32>
    %71 = vector.broadcast %70 : vector<32x1xf32> to vector<32x256xf32>
    %72 = arith.addf %69, %71 : vector<32x256xf32>
    %cst_30 = arith.constant dense<0.000000e+00> : vector<256xf32>
    %73 = vector.multi_reduction <add>, %72, %cst_30 [0] : vector<32x256xf32> to vector<256xf32>
    %74 = vector.shape_cast %73 : vector<256xf32> to vector<1x256xf32>
    %cst_31 = arith.constant 3.200000e+01 : f32
    %75 = vector.broadcast %cst_31 : f32 to vector<1x256xf32>
    %76 = arith.divf %74, %75 : vector<1x256xf32>
    %77 = vector.broadcast %76 : vector<1x256xf32> to vector<32x256xf32>
    %78 = arith.subf %72, %77 : vector<32x256xf32>
    %79 = arith.mulf %78, %78 : vector<32x256xf32>
    %cst_32 = arith.constant dense<0.000000e+00> : vector<256xf32>
    %80 = vector.multi_reduction <add>, %79, %cst_32 [0] : vector<32x256xf32> to vector<256xf32>
    %81 = vector.shape_cast %80 : vector<256xf32> to vector<1x256xf32>
    %cst_33 = arith.constant 3.200000e+01 : f32
    %82 = vector.broadcast %cst_33 : f32 to vector<1x256xf32>
    %83 = arith.divf %81, %82 : vector<1x256xf32>
    %84 = vector.broadcast %76 : vector<1x256xf32> to vector<32x256xf32>
    %85 = arith.subf %72, %84 : vector<32x256xf32>
    %cst_34 = arith.constant 9.99999974E-6 : f32
    %86 = vector.broadcast %cst_34 : f32 to vector<1x256xf32>
    %87 = arith.addf %83, %86 : vector<1x256xf32>
    %88 = math.rsqrt %87 : vector<1x256xf32>
    %89 = vector.broadcast %88 : vector<1x256xf32> to vector<32x256xf32>
    %90 = arith.mulf %85, %89 : vector<32x256xf32>
    %91 = vector.extract_strided_slice %3 {offsets = [0, 5], sizes = [32, 1], strides = [1, 1]} : vector<64x14xf32> to vector<32x1xf32>
    %92 = vector.broadcast %91 : vector<32x1xf32> to vector<32x256xf32>
    %93 = arith.mulf %90, %92 : vector<32x256xf32>
    %94 = vector.extract_strided_slice %3 {offsets = [0, 6], sizes = [32, 1], strides = [1, 1]} : vector<64x14xf32> to vector<32x1xf32>
    %95 = vector.broadcast %94 : vector<32x1xf32> to vector<32x256xf32>
    %96 = arith.addf %93, %95 : vector<32x256xf32>
    %cst_35 = arith.constant 0.000000e+00 : f32
    %97 = vector.broadcast %cst_35 : f32 to vector<32x256xf32>
    %98 = arith.maximumf %96, %97 : vector<32x256xf32>
    %99 = vector.extract_strided_slice %3 {offsets = [0, 7], sizes = [32, 1], strides = [1, 1]} : vector<64x14xf32> to vector<32x1xf32>
    %100 = vector.broadcast %99 : vector<32x1xf32> to vector<32x256xf32>
    %101 = arith.mulf %98, %100 : vector<32x256xf32>
    %cst_36 = arith.constant dense<0.000000e+00> : vector<256xf32>
    %102 = vector.multi_reduction <add>, %101, %cst_36 [0] : vector<32x256xf32> to vector<256xf32>
    %103 = vector.shape_cast %102 : vector<256xf32> to vector<1x256xf32>
    %104 = vector.extract_strided_slice %3 {offsets = [0, 8], sizes = [1, 1], strides = [1, 1]} : vector<64x14xf32> to vector<1x1xf32>
    %105 = vector.broadcast %104 : vector<1x1xf32> to vector<1x256xf32>
    %106 = arith.addf %103, %105 : vector<1x256xf32>
    %107 = vector.extract_strided_slice %66 {offsets = [32, 0], sizes = [32, 256], strides = [1, 1]} : vector<64x256xf32> to vector<32x256xf32>
    %108 = vector.extract_strided_slice %3 {offsets = [0, 9], sizes = [32, 1], strides = [1, 1]} : vector<64x14xf32> to vector<32x1xf32>
    %109 = vector.broadcast %108 : vector<32x1xf32> to vector<32x256xf32>
    %110 = arith.addf %107, %109 : vector<32x256xf32>
    %cst_37 = arith.constant dense<0.000000e+00> : vector<256xf32>
    %111 = vector.multi_reduction <add>, %110, %cst_37 [0] : vector<32x256xf32> to vector<256xf32>
    %112 = vector.shape_cast %111 : vector<256xf32> to vector<1x256xf32>
    %cst_38 = arith.constant 3.200000e+01 : f32
    %113 = vector.broadcast %cst_38 : f32 to vector<1x256xf32>
    %114 = arith.divf %112, %113 : vector<1x256xf32>
    %115 = vector.broadcast %114 : vector<1x256xf32> to vector<32x256xf32>
    %116 = arith.subf %110, %115 : vector<32x256xf32>
    %117 = arith.mulf %116, %116 : vector<32x256xf32>
    %cst_39 = arith.constant dense<0.000000e+00> : vector<256xf32>
    %118 = vector.multi_reduction <add>, %117, %cst_39 [0] : vector<32x256xf32> to vector<256xf32>
    %119 = vector.shape_cast %118 : vector<256xf32> to vector<1x256xf32>
    %cst_40 = arith.constant 3.200000e+01 : f32
    %120 = vector.broadcast %cst_40 : f32 to vector<1x256xf32>
    %121 = arith.divf %119, %120 : vector<1x256xf32>
    %122 = vector.broadcast %114 : vector<1x256xf32> to vector<32x256xf32>
    %123 = arith.subf %110, %122 : vector<32x256xf32>
    %cst_41 = arith.constant 9.99999974E-6 : f32
    %124 = vector.broadcast %cst_41 : f32 to vector<1x256xf32>
    %125 = arith.addf %121, %124 : vector<1x256xf32>
    %126 = math.rsqrt %125 : vector<1x256xf32>
    %127 = vector.broadcast %126 : vector<1x256xf32> to vector<32x256xf32>
    %128 = arith.mulf %123, %127 : vector<32x256xf32>
    %129 = vector.extract_strided_slice %3 {offsets = [0, 10], sizes = [32, 1], strides = [1, 1]} : vector<64x14xf32> to vector<32x1xf32>
    %130 = vector.broadcast %129 : vector<32x1xf32> to vector<32x256xf32>
    %131 = arith.mulf %128, %130 : vector<32x256xf32>
    %132 = vector.extract_strided_slice %3 {offsets = [0, 11], sizes = [32, 1], strides = [1, 1]} : vector<64x14xf32> to vector<32x1xf32>
    %133 = vector.broadcast %132 : vector<32x1xf32> to vector<32x256xf32>
    %134 = arith.addf %131, %133 : vector<32x256xf32>
    %cst_42 = arith.constant 0.000000e+00 : f32
    %135 = vector.broadcast %cst_42 : f32 to vector<32x256xf32>
    %136 = arith.maximumf %134, %135 : vector<32x256xf32>
    %137 = vector.extract_strided_slice %3 {offsets = [0, 12], sizes = [32, 1], strides = [1, 1]} : vector<64x14xf32> to vector<32x1xf32>
    %138 = vector.broadcast %137 : vector<32x1xf32> to vector<32x256xf32>
    %139 = arith.mulf %136, %138 : vector<32x256xf32>
    %cst_43 = arith.constant dense<0.000000e+00> : vector<256xf32>
    %140 = vector.multi_reduction <add>, %139, %cst_43 [0] : vector<32x256xf32> to vector<256xf32>
    %141 = vector.shape_cast %140 : vector<256xf32> to vector<1x256xf32>
    %142 = vector.extract_strided_slice %3 {offsets = [0, 13], sizes = [1, 1], strides = [1, 1]} : vector<64x14xf32> to vector<1x1xf32>
    %143 = vector.broadcast %142 : vector<1x1xf32> to vector<1x256xf32>
    %144 = arith.addf %141, %143 : vector<1x256xf32>
    %145 = arith.negf %144 : vector<1x256xf32>
    %146 = math.exp %145 : vector<1x256xf32>
    %cst_44 = arith.constant 1.000000e+00 : f32
    %147 = vector.broadcast %cst_44 : f32 to vector<1x256xf32>
    %148 = arith.addf %147, %146 : vector<1x256xf32>
    %149 = arith.divf %147, %148 : vector<1x256xf32>
    %150 = arith.mulf %106, %149 : vector<1x256xf32>
    %c0_45 = arith.constant 0 : index
    %c0_46 = arith.constant 0 : index
    %151 = vector.load %arg6[%c0_45, %c0_46] : memref<1x256xf32, #tpu.memory_space<vmem>>, vector<1x256xf32>
    %cst_47 = arith.constant 9.99999997E-7 : f32
    %152 = vector.broadcast %cst_47 : f32 to vector<1x256xf32>
    %153 = arith.addf %151, %152 : vector<1x256xf32>
    %cst_48 = arith.constant 5.000000e+00 : f32
    %154 = vector.broadcast %cst_48 : f32 to vector<1x256xf32>
    %155 = arith.addf %151, %154 : vector<1x256xf32>
    %156 = arith.mulf %153, %155 : vector<1x256xf32>
    %cst_49 = arith.constant 5.000000e+00 : f32
    %157 = vector.broadcast %cst_49 : f32 to vector<1x256xf32>
    %158 = arith.divf %157, %156 : vector<1x256xf32>
    %c0_50 = arith.constant 0 : index
    %c0_51 = arith.constant 0 : index
    %159 = vector.load %arg5[%c0_50, %c0_51] : memref<3x256xf32, #tpu.memory_space<vmem>>, vector<3x256xf32>
    %160 = arith.mulf %150, %158 : vector<1x256xf32>
    %161 = vector.broadcast %160 : vector<1x256xf32> to vector<3x256xf32>
    %162 = arith.mulf %159, %161 : vector<3x256xf32>
    %163 = tpu.iota {dimensions = array<i32: 1>} : vector<256x128xi32>
    %c0_52 = arith.constant 0 : index
    %c0_53 = arith.constant 0 : index
    %164 = vector.load %arg7[%c0_52, %c0_53] : memref<256x1xi32, #tpu.memory_space<vmem>>, vector<256x1xi32>
    %165 = vector.broadcast %164 : vector<256x1xi32> to vector<256x128xi32>
    %166 = arith.cmpi eq, %163, %165 : vector<256x128xi32>
    %167 = arith.extui %166 : vector<256x128xi1> to vector<256x128xi32>
    %168 = arith.sitofp %167 : vector<256x128xi32> to vector<256x128xf32>
    %c0_54 = arith.constant 0 : index
    %c0_55 = arith.constant 0 : index
    %c0_56 = arith.constant 0 : index
    %169 = vector.load %arg13[%c0_54, %c0_55, %c0_56] : memref<1x3x128xf32, #tpu.memory_space<vmem>>, vector<1x3x128xf32>
    %170 = vector.shape_cast %169 : vector<1x3x128xf32> to vector<3x128xf32>
    %cst_57 = arith.constant dense<0.000000e+00> : vector<3x128xf32>
    %171 = tpu.matmul %162, %168, %cst_57 {dimension_numbers = #tpu.dot_dimension_numbers<[1], [0], [0], [1], [0, 0, 1, 1], [], []>} : vector<3x256xf32>, vector<256x128xf32>, vector<3x128xf32> -> vector<3x128xf32>
    %172 = arith.addf %170, %171 : vector<3x128xf32>
    %c0_58 = arith.constant 0 : index
    %c0_59 = arith.constant 0 : index
    %c0_60 = arith.constant 0 : index
    %173 = vector.load %arg13[%c0_58, %c0_59, %c0_60] : memref<1x3x128xf32, #tpu.memory_space<vmem>>, vector<1x3x128xf32>
    %174 = vector.shape_cast %173 : vector<1x3x128xf32> to vector<3x128xf32>
    %175 = vector.shape_cast %172 : vector<3x128xf32> to vector<1x3x128xf32>
    tpu.vector_store %arg13[%c0_58, %c0_59, %c0_60], %175 {strides = array<i32>} : memref<1x3x128xf32, #tpu.memory_space<vmem>>, vector<1x3x128xf32>,
    return
  }
  func.func @transform_0(%arg0: i32, %arg1: i32) -> (i32, i32) {
    %c1_i32 = arith.constant 1 : i32
    %0 = arith.muli %arg0, %c1_i32 : i32
    %1 = arith.addi %0, %arg1 : i32
    %c0_i32 = arith.constant 0 : i32
    %c0_i32_0 = arith.constant 0 : i32
    return %c0_i32, %1 : i32, i32
  }
  func.func @transform_1(%arg0: i32, %arg1: i32) -> (i32, i32) {
    %c1_i32 = arith.constant 1 : i32
    %0 = arith.muli %arg0, %c1_i32 : i32
    %1 = arith.addi %0, %arg1 : i32
    %c0_i32 = arith.constant 0 : i32
    %c0_i32_0 = arith.constant 0 : i32
    return %c0_i32, %1 : i32, i32
  }
  func.func @transform_2(%arg0: i32, %arg1: i32) -> (i32, i32) {
    %c1_i32 = arith.constant 1 : i32
    %0 = arith.muli %arg0, %c1_i32 : i32
    %1 = arith.addi %0, %arg1 : i32
    %c0_i32 = arith.constant 0 : i32
    %c0_i32_0 = arith.constant 0 : i32
    return %c0_i32, %1 : i32, i32
  }
  func.func @transform_3(%arg0: i32, %arg1: i32) -> (i32, i32) {
    %c1_i32 = arith.constant 1 : i32
    %0 = arith.muli %arg0, %c1_i32 : i32
    %1 = arith.addi %0, %arg1 : i32
    %c0_i32 = arith.constant 0 : i32
    %c0_i32_0 = arith.constant 0 : i32
    return %c0_i32, %1 : i32, i32
  }
  func.func @transform_4(%arg0: i32, %arg1: i32) -> (i32, i32) {
    %c1_i32 = arith.constant 1 : i32
    %0 = arith.muli %arg0, %c1_i32 : i32
    %1 = arith.addi %0, %arg1 : i32
    %c0_i32 = arith.constant 0 : i32
    %c0_i32_0 = arith.constant 0 : i32
    return %c0_i32, %1 : i32, i32
  }
  func.func @transform_5(%arg0: i32, %arg1: i32) -> (i32, i32) {
    %c1_i32 = arith.constant 1 : i32
    %0 = arith.muli %arg0, %c1_i32 : i32
    %1 = arith.addi %0, %arg1 : i32
    %c0_i32 = arith.constant 0 : i32
    %c0_i32_0 = arith.constant 0 : i32
    return %1, %c0_i32 : i32, i32
  }
  func.func @transform_6(%arg0: i32, %arg1: i32) -> (i32, i32) {
    %c0_i32 = arith.constant 0 : i32
    %c0_i32_0 = arith.constant 0 : i32
    %c0_i32_1 = arith.constant 0 : i32
    return %c0_i32, %c0_i32_0 : i32, i32
  }
  func.func @transform_7(%arg0: i32, %arg1: i32) -> (i32, i32) {
    %c0_i32 = arith.constant 0 : i32
    %c0_i32_0 = arith.constant 0 : i32
    %c0_i32_1 = arith.constant 0 : i32
    return %c0_i32, %c0_i32_0 : i32, i32
  }
  func.func @transform_8(%arg0: i32, %arg1: i32) -> (i32, i32) {
    %c0_i32 = arith.constant 0 : i32
    %c0_i32_0 = arith.constant 0 : i32
    %c0_i32_1 = arith.constant 0 : i32
    return %c0_i32, %c0_i32_0 : i32, i32
  }
  func.func @transform_9(%arg0: i32, %arg1: i32) -> (i32, i32) {
    %c0_i32 = arith.constant 0 : i32
    %c0_i32_0 = arith.constant 0 : i32
    %c0_i32_1 = arith.constant 0 : i32
    return %c0_i32, %c0_i32_0 : i32, i32
  }
  func.func @transform_10(%arg0: i32, %arg1: i32) -> (i32, i32) {
    %c0_i32 = arith.constant 0 : i32
    %c0_i32_0 = arith.constant 0 : i32
    %c0_i32_1 = arith.constant 0 : i32
    return %c0_i32, %c0_i32_0 : i32, i32
  }
  func.func @transform_11(%arg0: i32, %arg1: i32) -> (i32, i32, i32) {
    %c0_i32 = arith.constant 0 : i32
    %c0_i32_0 = arith.constant 0 : i32
    %c0_i32_1 = arith.constant 0 : i32
    return %arg0, %c0_i32, %c0_i32_0 : i32, i32, i32
  }
}

</mosaic_0001>

<llo_original>
// kernel: tpu_custom_call.1
$region0: #{tpu_custom_call.1}
  #allocation0 [shape = 'u32[]', space=smem, size = 0x4, offset = 0x4, fixed_abs, tag = 'smem constant byte address 0x4 - core index']
  #allocation1 [shape = 'u32[144,128]{1,0:T(1,128)}', space=vmem, size = 0x12000, scoped, tag = 'internal scratch']
  %s0 = inlined_call_operand.vmem [shape: f32[64,512], index: 0, kind: input, shape index: {}]
  %s1 = inlined_call_operand.vmem [shape: f32[16,512], index: 1, kind: input, shape index: {}]
  %s2 = inlined_call_operand.vmem [shape: f32[8,512], index: 2, kind: input, shape index: {}]
  %s3 = inlined_call_operand.vmem [shape: f32[3,512], index: 3, kind: input, shape index: {}]
  %s4 = inlined_call_operand.vmem [shape: f32[1,512], index: 4, kind: input, shape index: {}]
  %s5 = inlined_call_operand.vmem [shape: s32[512,1], index: 5, kind: input, shape index: {}]
  %s6 = inlined_call_operand.vmem [shape: f32[64,64], index: 6, kind: input, shape index: {}]
  %s7 = inlined_call_operand.vmem [shape: f32[64,64], index: 7, kind: input, shape index: {}]
  %s8 = inlined_call_operand.vmem [shape: f32[64,88], index: 8, kind: input, shape index: {}]
  %s9 = inlined_call_operand.vmem [shape: f32[32,32], index: 9, kind: input, shape index: {}]
  %s10 = inlined_call_operand.vmem [shape: f32[64,14], index: 10, kind: input, shape index: {}]
  %s11 = inlined_call_operand.vmem [shape: f32[2,3,128], index: 11, kind: output, shape index: {}]
  %s12 = sld [smem:[#allocation0]]
  $region127: #{tpu_custom_call.1} parent=0
    _
  %s14 = ssub.s32 1, %s12
  %s15 = scalar_select 0, %s14, %s12
  $region1: #{tpu_custom_call.1} parent=0
    #allocation2 [shape = 'u8[131072]{0}', space=vmem, size = 0x20000, scoped, tag = 'input window, operand 0']
    #allocation3 [shape = 'u8[32768]{0}', space=vmem, size = 0x8000, scoped, tag = 'input window, operand 1']
    loop: start=0, step=1, limit=4
    $region2: #{tpu_custom_call.1} parent=1 // loop_pre_header
      _
    $region3: #{tpu_custom_call.1} parent=1 // loop_header
      %s17 = sphi 0, %s21
      %p18 = scmp.ge.s32.totalorder %s17, 4
      %s24 = sphi 0, %s36
      %s25 = sphi 0, %s32
      %s26 = sphi 0, %s24
      %s27 = sphi 0, %s25
      %s28 = sphi 0, %s26
      %s29 = sphi 0, %s27
      %s41 = sphi 0, %s43
      %s44 = sphi 0, %s41
      %s45 = sphi 0, %s44
      %s61 = sphi 0, %s45
      %s69 = sphi 0, %s71
      %s72 = sphi 0, %s69
      %s73 = sphi 0, %s72
      %s89 = sphi 0, %s73
      %s97 = sphi 0, %s99
      %s100 = sphi 0, %s97
      %s101 = sphi 0, %s100
      %s117 = sphi 0, %s101
      %s125 = sphi 0, %s127
      %s128 = sphi 0, %s125
      %s129 = sphi 0, %s128
      %s145 = sphi 0, %s129
      %s153 = sphi 0, %s155
      %s156 = sphi 0, %s153
      %s157 = sphi 0, %s156
      %s173 = sphi 0, %s157
      %s181 = sphi 0, %s183
      %s184 = sphi 0, %s181
      %s185 = sphi 0, %s184
      %s201 = sphi 0, %s185
      %s205 = sphi 0, %s205
      %s207 = sphi 0, %s205
      %s208 = sphi 0, %s207
      %s222 = sphi 0, %s208
      %s226 = sphi 0, %s226
      %s228 = sphi 0, %s226
      %s229 = sphi 0, %s228
      %s243 = sphi 0, %s229
      %s247 = sphi 0, %s247
      %s249 = sphi 0, %s247
      %s250 = sphi 0, %s249
      %s264 = sphi 0, %s250
      %s268 = sphi 0, %s268
      %s270 = sphi 0, %s268
      %s271 = sphi 0, %s270
      %s285 = sphi 0, %s271
      %s289 = sphi 0, %s289
      %s291 = sphi 0, %s289
      %s292 = sphi 0, %s291
      %s306 = sphi 0, %s292
      %s312 = sphi 0, %s314
      %s315 = sphi 0, %s312
      %s316 = sphi 0, %s315
      %s332 = sphi 0, %s316
    $region4: #{tpu_custom_call.1} parent=1 // loop_header_branch
      %20 = sbr.rel (%p18) target = $region8
    $region5: #{tpu_custom_call.1} parent=1 // loop_body
      %s22 = ssub.s32 %s17, 1
      %s23 = ssub.s32 %s17, 2
      %s30 = sadd.s32 1, %s25
      %p31 = scmp.ge.s32.totalorder %s30, 1
      %s32 = scalar_select %p31, 0, %s30
      %s33 = sadd.s32 1, %s24
      %s34 = scalar_select %p31, %s33, %s24
      %p35 = scmp.ge.s32.totalorder %s34, 2
      %s36 = scalar_select %p35, 0, %s34
      %s37 = sadd.s32 %s24, %s25
      %s38 = sadd.s32 %s36, %s32
      %s39 = ssub.s32 %s37, %s38
      %p40 = scmp.eq.s32.totalorder %s39, 0
      %s42 = sadd.s32 %s41, 1
      %s43 = scalar_select %p40, %s41, %s42
      %p46 = pneg %p40
      %p47 = scmp.eq.s32.totalorder %s17, 1
      %p48 = por %p46, %p47
      %p49 = scmp.ne.s32.totalorder %s41, %s44
      %p50 = scmp.eq.s32.totalorder %s17, 0
      %p51 = por %p49, %p50
      %p52 = scmp.ne.s32.totalorder %s41, %s44
      %p53 = scmp.eq.s32.totalorder %s22, 1
      %p54 = por %p52, %p53
      %p55 = scmp.ne.s32.totalorder %s44, %s45
      %p56 = scmp.eq.s32.totalorder %s22, 0
      %p57 = por %p55, %p56
      %p58 = scmp.ne.s32.totalorder %s44, %s45
      %p59 = scmp.eq.s32.totalorder %s23, 1
      %p60 = por %p58, %p59
      %p62 = scmp.ne.s32.totalorder %s45, %s61
      %p63 = scmp.eq.s32.totalorder %s23, 0
      %p64 = por %p62, %p63
      %s65 = sadd.s32 %s24, %s25
      %s66 = sadd.s32 %s36, %s32
      %s67 = ssub.s32 %s65, %s66
      %p68 = scmp.eq.s32.totalorder %s67, 0
      %s70 = sadd.s32 %s69, 1
      %s71 = scalar_select %p68, %s69, %s70
      %p74 = pneg %p68
      %p75 = scmp.eq.s32.totalorder %s17, 1
      %p76 = por %p74, %p75
      %p77 = scmp.ne.s32.totalorder %s69, %s72
      %p78 = scmp.eq.s32.totalorder %s17, 0
      %p79 = por %p77, %p78
      %p80 = scmp.ne.s32.totalorder %s69, %s72
      %p81 = scmp.eq.s32.totalorder %s22, 1
      %p82 = por %p80, %p81
      %p83 = scmp.ne.s32.totalorder %s72, %s73
      %p84 = scmp.eq.s32.totalorder %s22, 0
      %p85 = por %p83, %p84
      %p86 = scmp.ne.s32.totalorder %s72, %s73
      %p87 = scmp.eq.s32.totalorder %s23, 1
      %p88 = por %p86, %p87
      %p90 = scmp.ne.s32.totalorder %s73, %s89
      %p91 = scmp.eq.s32.totalorder %s23, 0
      %p92 = por %p90, %p91
      %s93 = sadd.s32 %s24, %s25
      %s94 = sadd.s32 %s36, %s32
      %s95 = ssub.s32 %s93, %s94
      %p96 = scmp.eq.s32.totalorder %s95, 0
      %s98 = sadd.s32 %s97, 1
      %s99 = scalar_select %p96, %s97, %s98
      %p102 = pneg %p96
      %p103 = scmp.eq.s32.totalorder %s17, 1
      %p104 = por %p102, %p103
      %p105 = scmp.ne.s32.totalorder %s97, %s100
      %p106 = scmp.eq.s32.totalorder %s17, 0
      %p107 = por %p105, %p106
      %p108 = scmp.ne.s32.totalorder %s97, %s100
      %p109 = scmp.eq.s32.totalorder %s22, 1
      %p110 = por %p108, %p109
      %p111 = scmp.ne.s32.totalorder %s100, %s101
      %p112 = scmp.eq.s32.totalorder %s22, 0
      %p113 = por %p111, %p112
      %p114 = scmp.ne.s32.totalorder %s100, %s101
      %p115 = scmp.eq.s32.totalorder %s23, 1
      %p116 = por %p114, %p115
      %p118 = scmp.ne.s32.totalorder %s101, %s117
      %p119 = scmp.eq.s32.totalorder %s23, 0
      %p120 = por %p118, %p119
      %s121 = sadd.s32 %s24, %s25
      %s122 = sadd.s32 %s36, %s32
      %s123 = ssub.s32 %s121, %s122
      %p124 = scmp.eq.s32.totalorder %s123, 0
      %s126 = sadd.s32 %s125, 1
      %s127 = scalar_select %p124, %s125, %s126
      %p130 = pneg %p124
      %p131 = scmp.eq.s32.totalorder %s17, 1
      %p132 = por %p130, %p131
      %p133 = scmp.ne.s32.totalorder %s125, %s128
      %p134 = scmp.eq.s32.totalorder %s17, 0
      %p135 = por %p133, %p134
      %p136 = scmp.ne.s32.totalorder %s125, %s128
      %p137 = scmp.eq.s32.totalorder %s22, 1
      %p138 = por %p136, %p137
      %p139 = scmp.ne.s32.totalorder %s128, %s129
      %p140 = scmp.eq.s32.totalorder %s22, 0
      %p141 = por %p139, %p140
      %p142 = scmp.ne.s32.totalorder %s128, %s129
      %p143 = scmp.eq.s32.totalorder %s23, 1
      %p144 = por %p142, %p143
      %p146 = scmp.ne.s32.totalorder %s129, %s145
      %p147 = scmp.eq.s32.totalorder %s23, 0
      %p148 = por %p146, %p147
      %s149 = sadd.s32 %s24, %s25
      %s150 = sadd.s32 %s36, %s32
      %s151 = ssub.s32 %s149, %s150
      %p152 = scmp.eq.s32.totalorder %s151, 0
      %s154 = sadd.s32 %s153, 1
      %s155 = scalar_select %p152, %s153, %s154
      %p158 = pneg %p152
      %p159 = scmp.eq.s32.totalorder %s17, 1
      %p160 = por %p158, %p159
      %p161 = scmp.ne.s32.totalorder %s153, %s156
      %p162 = scmp.eq.s32.totalorder %s17, 0
      %p163 = por %p161, %p162
      %p164 = scmp.ne.s32.totalorder %s153, %s156
      %p165 = scmp.eq.s32.totalorder %s22, 1
      %p166 = por %p164, %p165
      %p167 = scmp.ne.s32.totalorder %s156, %s157
      %p168 = scmp.eq.s32.totalorder %s22, 0
      %p169 = por %p167, %p168
      %p170 = scmp.ne.s32.totalorder %s156, %s157
      %p171 = scmp.eq.s32.totalorder %s23, 1
      %p172 = por %p170, %p171
      %p174 = scmp.ne.s32.totalorder %s157, %s173
      %p175 = scmp.eq.s32.totalorder %s23, 0
      %p176 = por %p174, %p175
      %s177 = sadd.s32 %s24, %s25
      %s178 = sadd.s32 %s36, %s32
      %s179 = ssub.s32 %s177, %s178
      %p180 = scmp.eq.s32.totalorder %s179, 0
      %s182 = sadd.s32 %s181, 1
      %s183 = scalar_select %p180, %s181, %s182
      %p186 = pneg %p180
      %p187 = scmp.eq.s32.totalorder %s17, 1
      %p188 = por %p186, %p187
      %p189 = scmp.ne.s32.totalorder %s181, %s184
      %p190 = scmp.eq.s32.totalorder %s17, 0
      %p191 = por %p189, %p190
      %p192 = scmp.ne.s32.totalorder %s181, %s184
      %p193 = scmp.eq.s32.totalorder %s22, 1
      %p194 = por %p192, %p193
      %p195 = scmp.ne.s32.totalorder %s184, %s185
      %p196 = scmp.eq.s32.totalorder %s22, 0
      %p197 = por %p195, %p196
      %p198 = scmp.ne.s32.totalorder %s184, %s185
      %p199 = scmp.eq.s32.totalorder %s23, 1
      %p200 = por %p198, %p199
      %p202 = scmp.ne.s32.totalorder %s185, %s201
      %p203 = scmp.eq.s32.totalorder %s23, 0
      %p204 = por %p202, %p203
      %s206 = sadd.s32 %s205, 1
      %p209 = scmp.eq.s32.totalorder %s17, 1
      %p210 = scmp.ne.s32.totalorder %s205, %s207
      %p211 = scmp.eq.s32.totalorder %s17, 0
      %p212 = por %p210, %p211
      %p213 = scmp.ne.s32.totalorder %s205, %s207
      %p214 = scmp.eq.s32.totalorder %s22, 1
      %p215 = por %p213, %p214
      %p216 = scmp.ne.s32.totalorder %s207, %s208
      %p217 = scmp.eq.s32.totalorder %s22, 0
      %p218 = por %p216, %p217
      %p219 = scmp.ne.s32.totalorder %s207, %s208
      %p220 = scmp.eq.s32.totalorder %s23, 1
      %p221 = por %p219, %p220
      %p223 = scmp.ne.s32.totalorder %s208, %s222
      %p224 = scmp.eq.s32.totalorder %s23, 0
      %p225 = por %p223, %p224
      %s227 = sadd.s32 %s226, 1
      %p230 = scmp.eq.s32.totalorder %s17, 1
      %p231 = scmp.ne.s32.totalorder %s226, %s228
      %p232 = scmp.eq.s32.totalorder %s17, 0
      %p233 = por %p231, %p232
      %p234 = scmp.ne.s32.totalorder %s226, %s228
      %p235 = scmp.eq.s32.totalorder %s22, 1
      %p236 = por %p234, %p235
      %p237 = scmp.ne.s32.totalorder %s228, %s229
      %p238 = scmp.eq.s32.totalorder %s22, 0
      %p239 = por %p237, %p238
      %p240 = scmp.ne.s32.totalorder %s228, %s229
      %p241 = scmp.eq.s32.totalorder %s23, 1
      %p242 = por %p240, %p241
      %p244 = scmp.ne.s32.totalorder %s229, %s243
      %p245 = scmp.eq.s32.totalorder %s23, 0
      %p246 = por %p244, %p245
      %s248 = sadd.s32 %s247, 1
      %p251 = scmp.eq.s32.totalorder %s17, 1
      %p252 = scmp.ne.s32.totalorder %s247, %s249
      %p253 = scmp.eq.s32.totalorder %s17, 0
      %p254 = por %p252, %p253
      %p255 = scmp.ne.s32.totalorder %s247, %s249
      %p256 = scmp.eq.s32.totalorder %s22, 1
      %p257 = por %p255, %p256
      %p258 = scmp.ne.s32.totalorder %s249, %s250
      %p259 = scmp.eq.s32.totalorder %s22, 0
      %p260 = por %p258, %p259
      %p261 = scmp.ne.s32.totalorder %s249, %s250
      %p262 = scmp.eq.s32.totalorder %s23, 1
      %p263 = por %p261, %p262
      %p265 = scmp.ne.s32.totalorder %s250, %s264
      %p266 = scmp.eq.s32.totalorder %s23, 0
      %p267 = por %p265, %p266
      %s269 = sadd.s32 %s268, 1
      %p272 = scmp.eq.s32.totalorder %s17, 1
      %p273 = scmp.ne.s32.totalorder %s268, %s270
      %p274 = scmp.eq.s32.totalorder %s17, 0
      %p275 = por %p273, %p274
      %p276 = scmp.ne.s32.totalorder %s268, %s270
      %p277 = scmp.eq.s32.totalorder %s22, 1
      %p278 = por %p276, %p277
      %p279 = scmp.ne.s32.totalorder %s270, %s271
      %p280 = scmp.eq.s32.totalorder %s22, 0
      %p281 = por %p279, %p280
      %p282 = scmp.ne.s32.totalorder %s270, %s271
      %p283 = scmp.eq.s32.totalorder %s23, 1
      %p284 = por %p282, %p283
      %p286 = scmp.ne.s32.totalorder %s271, %s285
      %p287 = scmp.eq.s32.totalorder %s23, 0
      %p288 = por %p286, %p287
      %s290 = sadd.s32 %s289, 1
      %p293 = scmp.eq.s32.totalorder %s17, 1
      %p294 = scmp.ne.s32.totalorder %s289, %s291
      %p295 = scmp.eq.s32.totalorder %s17, 0
      %p296 = por %p294, %p295
      %p297 = scmp.ne.s32.totalorder %s289, %s291
      %p298 = scmp.eq.s32.totalorder %s22, 1
      %p299 = por %p297, %p298
      %p300 = scmp.ne.s32.totalorder %s291, %s292
      %p301 = scmp.eq.s32.totalorder %s22, 0
      %p302 = por %p300, %p301
      %p303 = scmp.ne.s32.totalorder %s291, %s292
      %p304 = scmp.eq.s32.totalorder %s23, 1
      %p305 = por %p303, %p304
      %p307 = scmp.ne.s32.totalorder %s292, %s306
      %p308 = scmp.eq.s32.totalorder %s23, 0
      %p309 = por %p307, %p308
      %s310 = ssub.s32 %s24, %s36
      %p311 = scmp.eq.s32.totalorder %s310, 0
      %s313 = sadd.s32 %s312, 1
      %s314 = scalar_select %p311, %s312, %s313
      %p317 = pneg %p311
      %p318 = scmp.eq.s32.totalorder %s17, 1
      %p319 = por %p317, %p318
      %p320 = scmp.ne.s32.totalorder %s312, %s315
      %p321 = scmp.eq.s32.totalorder %s17, 0
      %p322 = por %p320, %p321
      %p323 = scmp.ne.s32.totalorder %s312, %s315
      %p324 = scmp.eq.s32.totalorder %s22, 1
      %p325 = por %p323, %p324
      %p326 = scmp.ne.s32.totalorder %s315, %s316
      %p327 = scmp.eq.s32.totalorder %s22, 0
      %p328 = por %p326, %p327
      %p329 = scmp.ne.s32.totalorder %s315, %s316
      %p330 = scmp.eq.s32.totalorder %s23, 1
      %p331 = por %p329, %p330
      %p333 = scmp.ne.s32.totalorder %s316, %s332
      %p334 = scmp.eq.s32.totalorder %s23, 0
      %p335 = por %p333, %p334
      %p336 = scmp.le.s32.totalorder 1, %s17
      %p337 = scmp.lt.s32.totalorder %s17, 3
      %p338 = pnand %p336, %p337
      %p339 = pneg %p338
      // Predicated region
      $region9: #{tpu_custom_call.1} parent=5 // pred_check
        _
      $region10: #{tpu_custom_call.1} parent=5 // pred_check_branch
        %341 = sbr.rel (%p338) target = $region12
      $region11: #{tpu_custom_call.1} parent=5 // pred_region
        %s342 = ssub.s32 %s17, 1
        // Predicated region
        $region13: #{tpu_custom_call.1} parent=11 // pred_check
          %p343 = pneg %p218
        $region14: #{tpu_custom_call.1} parent=11 // pred_check_branch
          %345 = sbr.rel (%p343) target = $region16
        $region15: #{tpu_custom_call.1} parent=11 // pred_region
          _
        $region16: #{tpu_custom_call.1} parent=11 // pred_fallthru
          _
        // Predicated region
        $region17: #{tpu_custom_call.1} parent=11 // pred_check
          %p346 = pneg %p239
        $region18: #{tpu_custom_call.1} parent=11 // pred_check_branch
          %348 = sbr.rel (%p346) target = $region20
        $region19: #{tpu_custom_call.1} parent=11 // pred_region
          _
        $region20: #{tpu_custom_call.1} parent=11 // pred_fallthru
          _
        // Predicated region
        $region21: #{tpu_custom_call.1} parent=11 // pred_check
          %p349 = pneg %p260
        $region22: #{tpu_custom_call.1} parent=11 // pred_check_branch
          %351 = sbr.rel (%p349) target = $region24
        $region23: #{tpu_custom_call.1} parent=11 // pred_region
          _
        $region24: #{tpu_custom_call.1} parent=11 // pred_fallthru
          _
        // Predicated region
        $region25: #{tpu_custom_call.1} parent=11 // pred_check
          %p352 = pneg %p281
        $region26: #{tpu_custom_call.1} parent=11 // pred_check_branch
          %354 = sbr.rel (%p352) target = $region28
        $region27: #{tpu_custom_call.1} parent=11 // pred_region
          _
        $region28: #{tpu_custom_call.1} parent=11 // pred_fallthru
          _
        // Predicated region
        $region29: #{tpu_custom_call.1} parent=11 // pred_check
          %p355 = pneg %p302
        $region30: #{tpu_custom_call.1} parent=11 // pred_check_branch
          %357 = sbr.rel (%p355) target = $region32
        $region31: #{tpu_custom_call.1} parent=11 // pred_region
          _
        $region32: #{tpu_custom_call.1} parent=11 // pred_fallthru
          _
      $region12: #{tpu_custom_call.1} parent=5 // pred_fallthru
        _
      %p358 = scmp.lt.s32.totalorder %s17, 2
      // Predicated region
      $region33: #{tpu_custom_call.1} parent=5 // pred_check
        %p359 = pneg %p358
      $region34: #{tpu_custom_call.1} parent=5 // pred_check_branch
        %361 = sbr.rel (%p359) target = $region36
      $region35: #{tpu_custom_call.1} parent=5 // pred_region
        // Predicated region
        $region37: #{tpu_custom_call.1} parent=35 // pred_check
          %p362 = pneg %p51
        $region38: #{tpu_custom_call.1} parent=35 // pred_check_branch
          %364 = sbr.rel (%p362) target = $region40
        $region39: #{tpu_custom_call.1} parent=35 // pred_region
          %s365 = sand.u32 %s41, 1
          %s366 = sand.u32 %s41, 1
          %s367 = smul.addr %s366, 128
          %s368 = scalar_lea.vmem [#allocation2], %s367
          %s369 = sadd.s32 %s24, %s25
          %s370 = smul.u32 2, %s369
          %s371 = smul.addr %s370, 8
          %s372 = scalar_lea.vmem %s0, %s371
          // Predicated region
          $region41: #{tpu_custom_call.1} parent=39 // pred_check
            _
          $region42: #{tpu_custom_call.1} parent=39 // pred_check_branch
            %374 = sbr.rel (0) target = $region44
          $region43: #{tpu_custom_call.1} parent=39 // pred_region
            // Predicated region
            $region45: #{tpu_custom_call.1} parent=43 // pred_check
              _
            $region46: #{tpu_custom_call.1} parent=43 // pred_check_branch
              %376 = sbr.rel (0) target = $region48
            $region47: #{tpu_custom_call.1} parent=43 // pred_region
              loop: start=0, step=1, limit=1
              $region49: #{tpu_custom_call.1} parent=47 // loop_pre_header
                _
              $region50: #{tpu_custom_call.1} parent=47 // loop_header
                %s378 = sphi 0, %s382
                %p379 = scmp.ge.s32.totalorder %s378, 1
                %s383 = sphi %s372, %s372
                %s384 = sphi %s368, %s368
              $region51: #{tpu_custom_call.1} parent=47 // loop_header_branch
                %381 = sbr.rel (%p379) target = $region55
              $region52: #{tpu_custom_call.1} parent=47 // loop_body
                %v385 = vld [vmem:[%s383] sm:$0xff]
                %386 = vst [vmem:[%s384] sm:$0xff] %v385
                %v387 = vld [vmem:[%s383 + $0x8] sm:$0xff]
                %388 = vst [vmem:[%s384 + $0x8] sm:$0xff] %v387
                %v389 = vld [vmem:[%s383 + $0x20] sm:$0xff]
                %390 = vst [vmem:[%s384 + $0x10] sm:$0xff] %v389
                %v391 = vld [vmem:[%s383 + $0x28] sm:$0xff]
                %392 = vst [vmem:[%s384 + $0x18] sm:$0xff] %v391
                %v393 = vld [vmem:[%s383 + $0x40] sm:$0xff]
                %394 = vst [vmem:[%s384 + $0x20] sm:$0xff] %v393
                %v395 = vld [vmem:[%s383 + $0x48] sm:$0xff]
                %396 = vst [vmem:[%s384 + $0x28] sm:$0xff] %v395
                %v397 = vld [vmem:[%s383 + $0x60] sm:$0xff]
                %398 = vst [vmem:[%s384 + $0x30] sm:$0xff] %v397
                %v399 = vld [vmem:[%s383 + $0x68] sm:$0xff]
                %400 = vst [vmem:[%s384 + $0x38] sm:$0xff] %v399
                %v401 = vld [vmem:[%s383 + $0x80] sm:$0xff]
                %402 = vst [vmem:[%s384 + $0x40] sm:$0xff] %v401
                %v403 = vld [vmem:[%s383 + $0x88] sm:$0xff]
                %404 = vst [vmem:[%s384 + $0x48] sm:$0xff] %v403
                %v405 = vld [vmem:[%s383 + $0xa0] sm:$0xff]
                %406 = vst [vmem:[%s384 + $0x50] sm:$0xff] %v405
                %v407 = vld [vmem:[%s383 + $0xa8] sm:$0xff]
                %408 = vst [vmem:[%s384 + $0x58] sm:$0xff] %v407
                %v409 = vld [vmem:[%s383 + $0xc0] sm:$0xff]
                %410 = vst [vmem:[%s384 + $0x60] sm:$0xff] %v409
                %v411 = vld [vmem:[%s383 + $0xc8] sm:$0xff]
                %412 = vst [vmem:[%s384 + $0x68] sm:$0xff] %v411
                %v413 = vld [vmem:[%s383 + $0xe0] sm:$0xff]
                %414 = vst [vmem:[%s384 + $0x70] sm:$0xff] %v413
                %v415 = vld [vmem:[%s383 + $0xe8] sm:$0xff]
                %416 = vst [vmem:[%s384 + $0x78] sm:$0xff] %v415
              $region53: #{tpu_custom_call.1} parent=47 // loop_footer
                %s382 = sadd.s32 1, %s378
              $region54: #{tpu_custom_call.1} parent=47 // loop_footer_branch
                %377 = sbr.rel target = $region50
              $region55: #{tpu_custom_call.1} parent=47 // loop_exit
                _
            $region48: #{tpu_custom_call.1} parent=43 // pred_fallthru
              _
            // Predicated region
            $region56: #{tpu_custom_call.1} parent=43 // pred_check
              _
            $region57: #{tpu_custom_call.1} parent=43 // pred_check_branch
              %418 = sbr.rel target = $region59
            $region58: #{tpu_custom_call.1} parent=43 // pred_region
              _
            $region59: #{tpu_custom_call.1} parent=43 // pred_fallthru
              _
          $region44: #{tpu_custom_call.1} parent=39 // pred_fallthru
            _
          %419 = vnop
        $region40: #{tpu_custom_call.1} parent=35 // pred_fallthru
          _
        // Predicated region
        $region60: #{tpu_custom_call.1} parent=35 // pred_check
          %p420 = pneg %p79
        $region61: #{tpu_custom_call.1} parent=35 // pred_check_branch
          %422 = sbr.rel (%p420) target = $region63
        $region62: #{tpu_custom_call.1} parent=35 // pred_region
          %s423 = sand.u32 %s69, 1
          %s424 = sand.u32 %s69, 1
          %s425 = smul.addr %s424, 32
          %s426 = scalar_lea.vmem [#allocation3], %s425
          %s427 = sadd.s32 %s24, %s25
          %s428 = smul.u32 2, %s427
          %s429 = smul.addr %s428, 8
          %s430 = scalar_lea.vmem %s1, %s429
          // Predicated region
          $region64: #{tpu_custom_call.1} parent=62 // pred_check
            _
          $region65: #{tpu_custom_call.1} parent=62 // pred_check_branch
            %432 = sbr.rel (0) target = $region67
          $region66: #{tpu_custom_call.1} parent=62 // pred_region
            // Predicated region
            $region68: #{tpu_custom_call.1} parent=66 // pred_check
              _
            $region69: #{tpu_custom_call.1} parent=66 // pred_check_branch
              %434 = sbr.rel (0) target = $region71
            $region70: #{tpu_custom_call.1} parent=66 // pred_region
              loop: start=0, step=1, limit=1
              $region72: #{tpu_custom_call.1} parent=70 // loop_pre_header
                _
              $region73: #{tpu_custom_call.1} parent=70 // loop_header
                %s436 = sphi 0, %s440
                %p437 = scmp.ge.s32.totalorder %s436, 1
                %s441 = sphi %s430, %s430
                %s442 = sphi %s426, %s426
              $region74: #{tpu_custom_call.1} parent=70 // loop_header_branch
                %439 = sbr.rel (%p437) target = $region78
              $region75: #{tpu_custom_call.1} parent=70 // loop_body
                %v443 = vld [vmem:[%s441] sm:$0xff]
                %444 = vst [vmem:[%s442] sm:$0xff] %v443
                %v445 = vld [vmem:[%s441 + $0x8] sm:$0xff]
                %446 = vst [vmem:[%s442 + $0x8] sm:$0xff] %v445
                %v447 = vld [vmem:[%s441 + $0x20] sm:$0xff]
                %448 = vst [vmem:[%s442 + $0x10] sm:$0xff] %v447
                %v449 = vld [vmem:[%s441 + $0x28] sm:$0xff]
                %450 = vst [vmem:[%s442 + $0x18] sm:$0xff] %v449
              $region76: #{tpu_custom_call.1} parent=70 // loop_footer
                %s440 = sadd.s32 1, %s436
              $region77: #{tpu_custom_call.1} parent=70 // loop_footer_branch
                %435 = sbr.rel target = $region73
              $region78: #{tpu_custom_call.1} parent=70 // loop_exit
                _
            $region71: #{tpu_custom_call.1} parent=66 // pred_fallthru
              _
            // Predicated region
            $region79: #{tpu_custom_call.1} parent=66 // pred_check
              _
            $region80: #{tpu_custom_call.1} parent=66 // pred_check_branch
              %452 = sbr.rel target = $region82
            $region81: #{tpu_custom_call.1} parent=66 // pred_region
              _
            $region82: #{tpu_custom_call.1} parent=66 // pred_fallthru
              _
          $region67: #{tpu_custom_call.1} parent=62 // pred_fallthru
            _
          %453 = vnop
        $region63: #{tpu_custom_call.1} parent=35 // pred_fallthru
          _
        // Predicated region
        $region83: #{tpu_custom_call.1} parent=35 // pred_check
          %p454 = pneg %p107
        $region84: #{tpu_custom_call.1} parent=35 // pred_check_branch
          %456 = sbr.rel (%p454) target = $region86
        $region85: #{tpu_custom_call.1} parent=35 // pred_region
          %s457 = sadd.s32 %s24, %s25
          %s458 = smul.u32 2, %s457
          %p459 = scmp.lt.s32.totalorder %s458, 3
          %s460 = scalar_select %p459, %s458, 3
          %s461 = smul.addr %s460, 8
          %s462 = scalar_lea.vmem %s2, %s461
          %s463 = sadd.s32 %s24, %s25
          %s464 = smul.u32 2, %s463
        $region86: #{tpu_custom_call.1} parent=35 // pred_fallthru
          _
        // Predicated region
        $region87: #{tpu_custom_call.1} parent=35 // pred_check
          %p465 = pneg %p135
        $region88: #{tpu_custom_call.1} parent=35 // pred_check_branch
          %467 = sbr.rel (%p465) target = $region90
        $region89: #{tpu_custom_call.1} parent=35 // pred_region
          %s468 = sadd.s32 %s24, %s25
          %s469 = smul.u32 2, %s468
          %p470 = scmp.lt.s32.totalorder %s469, 3
          %s471 = scalar_select %p470, %s469, 3
          %s472 = smul.addr %s471, 4
          %s473 = scalar_lea.vmem %s3, %s472
          %s474 = sadd.s32 %s24, %s25
          %s475 = smul.u32 2, %s474
        $region90: #{tpu_custom_call.1} parent=35 // pred_fallthru
          _
        // Predicated region
        $region91: #{tpu_custom_call.1} parent=35 // pred_check
          %p476 = pneg %p163
        $region92: #{tpu_custom_call.1} parent=35 // pred_check_branch
          %478 = sbr.rel (%p476) target = $region94
        $region93: #{tpu_custom_call.1} parent=35 // pred_region
          %s479 = sadd.s32 %s24, %s25
          %s480 = smul.u32 2, %s479
          %p481 = scmp.lt.s32.totalorder %s480, 3
          %s482 = scalar_select %p481, %s480, 3
          %s483 = scalar_lea.vmem %s4, %s482
          %s484 = sadd.s32 %s24, %s25
          %s485 = smul.u32 2, %s484
        $region94: #{tpu_custom_call.1} parent=35 // pred_fallthru
          _
        // Predicated region
        $region95: #{tpu_custom_call.1} parent=35 // pred_check
          %p486 = pneg %p191
        $region96: #{tpu_custom_call.1} parent=35 // pred_check_branch
          %488 = sbr.rel (%p486) target = $region98
        $region97: #{tpu_custom_call.1} parent=35 // pred_region
          %s489 = sadd.s32 %s24, %s25
          %s490 = smul.u32 32, %s489
          %p491 = scmp.lt.s32.totalorder %s490, 63
          %s492 = scalar_select %p491, %s490, 63
          %s493 = smul.addr %s492, 8
          %s494 = scalar_lea.vmem %s5, %s493
          %s495 = sadd.s32 %s24, %s25
          %s496 = smul.u32 32, %s495
        $region98: #{tpu_custom_call.1} parent=35 // pred_fallthru
          _
      $region36: #{tpu_custom_call.1} parent=5 // pred_fallthru
        _
      %p497 = scmp.le.s32.totalorder 1, %s17
      %p498 = scmp.lt.s32.totalorder %s17, 3
      %p499 = pnand %p497, %p498
      %p500 = pneg %p499
      // Predicated region
      $region99: #{tpu_custom_call.1} parent=5 // pred_check
        _
      $region100: #{tpu_custom_call.1} parent=5 // pred_check_branch
        %502 = sbr.rel (%p499) target = $region102
      $region101: #{tpu_custom_call.1} parent=5 // pred_region
        %s503 = ssub.s32 %s17, 1
        %s504 = sand.u32 %s44, 1
        %s505 = sand.u32 %s44, 1
        %s506 = smul.addr %s505, 128
        %s507 = scalar_lea.vmem [#allocation2], %s506
        // Predicated region
        $region103: #{tpu_custom_call.1} parent=101 // pred_check
          %p508 = pneg %p57
        $region104: #{tpu_custom_call.1} parent=101 // pred_check_branch
          %510 = sbr.rel (%p508) target = $region106
        $region105: #{tpu_custom_call.1} parent=101 // pred_region
          _
        $region106: #{tpu_custom_call.1} parent=101 // pred_fallthru
          _
        %s511 = sand.u32 %s72, 1
        %s512 = sand.u32 %s72, 1
        %s513 = smul.addr %s512, 32
        %s514 = scalar_lea.vmem [#allocation3], %s513
        // Predicated region
        $region107: #{tpu_custom_call.1} parent=101 // pred_check
          %p515 = pneg %p85
        $region108: #{tpu_custom_call.1} parent=101 // pred_check_branch
          %517 = sbr.rel (%p515) target = $region110
        $region109: #{tpu_custom_call.1} parent=101 // pred_region
          _
        $region110: #{tpu_custom_call.1} parent=101 // pred_fallthru
          _
        %s518 = sand.u32 %s44, 1
        %s519 = sand.u32 %s44, 1
        %s520 = smul.addr %s519, 128
        %s521 = scalar_lea.vmem [#allocation2], %s520
        %p522 = pneg %p57
        %p523 = pneg %p54
        %s524 = sand.u32 %s72, 1
        %s525 = sand.u32 %s72, 1
        %s526 = smul.addr %s525, 32
        %s527 = scalar_lea.vmem [#allocation3], %s526
        %p528 = pneg %p85
        %p529 = pneg %p82
        %s530 = sadd.s32 %s26, %s27
        %s531 = smul.u32 2, %s530
        %p532 = scmp.lt.s32.totalorder %s531, 3
        %s533 = scalar_select %p532, %s531, 3
        %s534 = smul.addr %s533, 8
        %s535 = scalar_lea.vmem %s2, %s534
        %p536 = pneg %p113
        %p537 = pneg %p110
        %s538 = sadd.s32 %s26, %s27
        %s539 = smul.u32 2, %s538
        %p540 = scmp.lt.s32.totalorder %s539, 3
        %s541 = scalar_select %p540, %s539, 3
        %s542 = smul.addr %s541, 4
        %s543 = scalar_lea.vmem %s3, %s542
        %p544 = pneg %p141
        %p545 = pneg %p138
        %s546 = sadd.s32 %s26, %s27
        %s547 = smul.u32 2, %s546
        %p548 = scmp.lt.s32.totalorder %s547, 3
        %s549 = scalar_select %p548, %s547, 3
        %s550 = scalar_lea.vmem %s4, %s549
        %p551 = pneg %p169
        %p552 = pneg %p166
        %s553 = sadd.s32 %s26, %s27
        %s554 = smul.u32 32, %s553
        %p555 = scmp.lt.s32.totalorder %s554, 63
        %s556 = scalar_select %p555, %s554, 63
        %s557 = smul.addr %s556, 8
        %s558 = scalar_lea.vmem %s5, %s557
        %p559 = pneg %p197
        %p560 = pneg %p194
        %p561 = pneg %p218
        %p562 = pneg %p215
        %p563 = pneg %p239
        %p564 = pneg %p236
        %p565 = pneg %p260
        %p566 = pneg %p257
        %p567 = pneg %p281
        %p568 = pneg %p278
        %p569 = pneg %p302
        %p570 = pneg %p299
        %p571 = pneg %p328
        %p572 = pneg %p325
        %p573 = scmp.lt.s32.totalorder %s26, 1
        %s574 = scalar_select %p573, %s26, 1
        %s575 = smul.addr %s574, 4
        %s576 = scalar_lea.vmem %s11, %s575
        %s577 = sadd.s32 %s26, %s27
        %s578 = smul.u32 2, %s577
        %s579 = sadd.s32 %s26, %s27
        %s580 = smul.u32 2, %s579
        %s581 = sadd.s32 %s26, %s27
        %s582 = smul.u32 2, %s581
        %p583 = scmp.lt.s32.totalorder %s582, 3
        %s584 = scalar_select %p583, %s582, 3
        %s585 = smul.addr %s584, 8
        %s586 = scalar_lea.vmem %s2, %s585
        %s587 = sadd.s32 %s26, %s27
        %s588 = smul.u32 2, %s587
        %s589 = sadd.s32 %s26, %s27
        %s590 = smul.u32 2, %s589
        %p591 = scmp.lt.s32.totalorder %s590, 3
        %s592 = scalar_select %p591, %s590, 3
        %s593 = smul.addr %s592, 4
        %s594 = scalar_lea.vmem %s3, %s593
        %s595 = sadd.s32 %s26, %s27
        %s596 = smul.u32 2, %s595
        %s597 = sadd.s32 %s26, %s27
        %s598 = smul.u32 2, %s597
        %p599 = scmp.lt.s32.totalorder %s598, 3
        %s600 = scalar_select %p599, %s598, 3
        %s601 = scalar_lea.vmem %s4, %s600
        %s602 = sadd.s32 %s26, %s27
        %s603 = smul.u32 2, %s602
        %s604 = sadd.s32 %s26, %s27
        %s605 = smul.u32 32, %s604
        %p606 = scmp.lt.s32.totalorder %s605, 63
        %s607 = scalar_select %p606, %s605, 63
        %s608 = smul.addr %s607, 8
        %s609 = scalar_lea.vmem %s5, %s608
        %s610 = sadd.s32 %s26, %s27
        %s611 = smul.u32 32, %s610
        %p612 = scmp.lt.s32.totalorder %s26, 1
        %s613 = scalar_select %p612, %s26, 1
        %s614 = smul.addr %s613, 4
        %s615 = scalar_lea.vmem %s11, %s614
        %p616 = scmp.eq.s32.totalorder %s27, 0
        // Predicated region
        $region111: #{tpu_custom_call.1} parent=101 // pred_check
          %p617 = pneg %p616
        $region112: #{tpu_custom_call.1} parent=101 // pred_check_branch
          %619 = sbr.rel (%p617) target = $region114
        $region113: #{tpu_custom_call.1} parent=101 // pred_region
          %620 = vst [vmem:[%s615] sm:$0x7] 0.0
        $region114: #{tpu_custom_call.1} parent=101 // pred_fallthru
          _
        %v621 = vld [vmem:[%s10] sm:$0xff]
        %v622 = vld [vmem:[%s10 + $0x8] sm:$0xff]
        %v623 = vld [vmem:[%s10 + $0x10] sm:$0xff]
        %v624 = vld [vmem:[%s10 + $0x18] sm:$0xff]
        %v625 = vld [vmem:[%s10 + $0x20] sm:$0xff]
        %v626 = vld [vmem:[%s10 + $0x28] sm:$0xff]
        %v627 = vld [vmem:[%s10 + $0x30] sm:$0xff]
        %v628 = vld [vmem:[%s10 + $0x38] sm:$0xff]
        %v629 = vld [vmem:[%s6] sm:$0xff]
        %v630 = vld [vmem:[%s6 + $0x8] sm:$0xff]
        %v631 = vld [vmem:[%s6 + $0x10] sm:$0xff]
        %v632 = vld [vmem:[%s6 + $0x18] sm:$0xff]
        %v633 = vld [vmem:[%s6 + $0x20] sm:$0xff]
        %v634 = vld [vmem:[%s6 + $0x28] sm:$0xff]
        %v635 = vld [vmem:[%s6 + $0x30] sm:$0xff]
        %v636 = vld [vmem:[%s6 + $0x38] sm:$0xff]
        %v637 = vld [vmem:[%s507] sm:$0xff]
        %v638 = vld [vmem:[%s507 + $0x8] sm:$0xff]
        %v639 = vld [vmem:[%s507 + $0x10] sm:$0xff]
        %v640 = vld [vmem:[%s507 + $0x18] sm:$0xff]
        %v641 = vld [vmem:[%s507 + $0x20] sm:$0xff]
        %v642 = vld [vmem:[%s507 + $0x28] sm:$0xff]
        %v643 = vld [vmem:[%s507 + $0x30] sm:$0xff]
        %v644 = vld [vmem:[%s507 + $0x38] sm:$0xff]
        %v645 = vld [vmem:[%s507 + $0x40] sm:$0xff]
        %v646 = vld [vmem:[%s507 + $0x48] sm:$0xff]
        %v647 = vld [vmem:[%s507 + $0x50] sm:$0xff]
        %v648 = vld [vmem:[%s507 + $0x58] sm:$0xff]
        %v649 = vld [vmem:[%s507 + $0x60] sm:$0xff]
        %v650 = vld [vmem:[%s507 + $0x68] sm:$0xff]
        %v651 = vld [vmem:[%s507 + $0x70] sm:$0xff]
        %v652 = vld [vmem:[%s507 + $0x78] sm:$0xff]
        %654 = vset.pattern.permute.xlu0 0
        %655 = vperm.xlu0 %654, %v621
        %v656 = vpop.permute.xlu0 %655
        %659 = vset.pattern.permute.xlu0 0
        %660 = vperm.xlu0 %659, %v622
        %v661 = vpop.permute.xlu0 %660
        %664 = vset.pattern.permute.xlu0 0
        %665 = vperm.xlu0 %664, %v623
        %v666 = vpop.permute.xlu0 %665
        %669 = vset.pattern.permute.xlu0 0
        %670 = vperm.xlu0 %669, %v624
        %v671 = vpop.permute.xlu0 %670
        %674 = vset.pattern.permute.xlu0 0
        %675 = vperm.xlu0 %674, %v625
        %v676 = vpop.permute.xlu0 %675
        %679 = vset.pattern.permute.xlu0 0
        %680 = vperm.xlu0 %679, %v626
        %v681 = vpop.permute.xlu0 %680
        %684 = vset.pattern.permute.xlu0 0
        %685 = vperm.xlu0 %684, %v627
        %v686 = vpop.permute.xlu0 %685
        %689 = vset.pattern.permute.xlu0 0
        %690 = vperm.xlu0 %689, %v628
        %v691 = vpop.permute.xlu0 %690
        %vm693 = vcmask 523264
        %v695 = vsel %vm693, %v629, 0
        %v698 = vsel %vm693, %v630, 0
        %v701 = vsel %vm693, %v631, 0
        %v704 = vsel %vm693, %v632, 0
        %v707 = vsel %vm693, %v633, 0
        %v710 = vsel %vm693, %v634, 0
        %v713 = vsel %vm693, %v635, 0
        %v716 = vsel %vm693, %v636, 0
        %718 = vmatprep.subr.mxu0 %v638
        %719 = vmatpush1.msra.mxu0 %v637
        %720 = vmatprep.subr.mxu0 %v640
        %721 = vmatpush1.msra.mxu0 %v639
        %722 = vmatprep.subr.mxu0 %v642
        %723 = vmatpush1.msra.mxu0 %v641
        %724 = vmatprep.subr.mxu0 %v644
        %725 = vmatpush1.msra.mxu0 %v643
        %726 = vmatprep.subr.mxu0 %v646
        %727 = vmatpush1.msra.mxu0 %v645
        %728 = vmatprep.subr.mxu0 %v648
        %729 = vmatpush1.msra.mxu0 %v647
        %730 = vmatprep.subr.mxu0 %v650
        %731 = vmatpush1.msra.mxu0 %v649
        %732 = vmatprep.subr.mxu0 %v652
        %733 = vmatpush1.msra.mxu0 %v651
        %734 = vmatprep.subr.mxu0 0.0
        %735 = vmatpush1.msra.mxu0 0.0
        %736 = vmatprep.subr.mxu0 0.0
        %737 = vmatpush1.msra.mxu0 0.0
        %738 = vmatprep.subr.mxu0 0.0
        %739 = vmatpush1.msra.mxu0 0.0
        %740 = vmatprep.subr.mxu0 0.0
        %741 = vmatpush1.msra.mxu0 0.0
        %742 = vmatprep.subr.mxu0 0.0
        %743 = vmatpush1.msra.mxu0 0.0
        %744 = vmatprep.subr.mxu0 0.0
        %745 = vmatpush1.msra.mxu0 0.0
        %746 = vmatprep.subr.mxu0 0.0
        %747 = vmatpush1.msra.mxu0 0.0
        %748 = vmatprep.subr.mxu0 0.0
        %749 = vmatpush1.msra.mxu0 0.0
        %750 = vmatprep.subr.mxu0 0.0
        %751 = vmatpush1.msra.mxu0 0.0
        %752 = vmatprep.subr.mxu0 0.0
        %753 = vmatpush1.msra.mxu0 0.0
        %754 = vmatprep.subr.mxu0 0.0
        %755 = vmatpush1.msra.mxu0 0.0
        %756 = vmatprep.subr.mxu0 0.0
        %757 = vmatpush1.msra.mxu0 0.0
        %758 = vmatprep.subr.mxu0 0.0
        %759 = vmatpush1.msra.mxu0 0.0
        %760 = vmatprep.subr.mxu0 0.0
        %761 = vmatpush1.msra.mxu0 0.0
        %762 = vmatprep.subr.mxu0 0.0
        %763 = vmatpush1.msra.mxu0 0.0
        %764 = vmatprep.subr.mxu0 0.0
        %765 = vmatpush1.msra.mxu0 0.0
        %766 = vmatprep.subr.mxu0 0.0
        %767 = vmatpush1.msra.mxu0 0.0
        %768 = vmatprep.subr.mxu0 0.0
        %769 = vmatpush1.msra.mxu0 0.0
        %770 = vmatprep.subr.mxu0 0.0
        %771 = vmatpush1.msra.mxu0 0.0
        %772 = vmatprep.subr.mxu0 0.0
        %773 = vmatpush1.msra.mxu0 0.0
        %774 = vmatprep.subr.mxu0 0.0
        %775 = vmatpush1.msra.mxu0 0.0
        %776 = vmatprep.subr.mxu0 0.0
        %777 = vmatpush1.msra.mxu0 0.0
        %778 = vmatprep.subr.mxu0 0.0
        %779 = vmatpush1.msra.mxu0 0.0
        %780 = vmatprep.subr.mxu0 0.0
        %781 = vmatpush1.msra.mxu0 0.0
        %782 = vmatprep.mubr.f32.mxu0 0.0
        %783 = vmatmul.mubr.f32.gmra.mrb[0].mxu0 %v695
        %v784 = vpop.f32.mrb[0].mxu0
        %v785 = vadd.f32 %v656, %v784
        %v786 = vpop.f32.mrb[0].mxu0
        %v787 = vadd.f32 %v656, %v786
        %788 = vmatprep.mubr.f32.mxu0 0.0
        %789 = vmatmul.mubr.f32.gmra.mrb[0].mxu0 %v698
        %v790 = vpop.f32.mrb[0].mxu0
        %v791 = vadd.f32 %v661, %v790
        %v792 = vpop.f32.mrb[0].mxu0
        %v793 = vadd.f32 %v661, %v792
        %794 = vmatprep.mubr.f32.mxu0 0.0
        %795 = vmatmul.mubr.f32.gmra.mrb[0].mxu0 %v701
        %v796 = vpop.f32.mrb[0].mxu0
        %v797 = vadd.f32 %v666, %v796
        %v798 = vpop.f32.mrb[0].mxu0
        %v799 = vadd.f32 %v666, %v798
        %800 = vmatprep.mubr.f32.mxu0 0.0
        %801 = vmatmul.mubr.f32.gmra.mrb[0].mxu0 %v704
        %v802 = vpop.f32.mrb[0].mxu0
        %v803 = vadd.f32 %v671, %v802
        %v804 = vpop.f32.mrb[0].mxu0
        %v805 = vadd.f32 %v671, %v804
        %806 = vmatprep.mubr.f32.mxu0 0.0
        %807 = vmatmul.mubr.f32.gmra.mrb[0].mxu0 %v707
        %v808 = vpop.f32.mrb[0].mxu0
        %v809 = vadd.f32 %v676, %v808
        %v810 = vpop.f32.mrb[0].mxu0
        %v811 = vadd.f32 %v676, %v810
        %812 = vmatprep.mubr.f32.mxu0 0.0
        %813 = vmatmul.mubr.f32.gmra.mrb[0].mxu0 %v710
        %v814 = vpop.f32.mrb[0].mxu0
        %v815 = vadd.f32 %v681, %v814
        %v816 = vpop.f32.mrb[0].mxu0
        %v817 = vadd.f32 %v681, %v816
        %818 = vmatprep.mubr.f32.mxu0 0.0
        %819 = vmatmul.mubr.f32.gmra.mrb[0].mxu0 %v713
        %v820 = vpop.f32.mrb[0].mxu0
        %v821 = vadd.f32 %v686, %v820
        %v822 = vpop.f32.mrb[0].mxu0
        %v823 = vadd.f32 %v686, %v822
        %824 = vmatprep.mubr.f32.mxu0 0.0
        %825 = vmatmul.mubr.f32.gmra.mrb[0].mxu0 %v716
        %v826 = vpop.f32.mrb[0].mxu0
        %v827 = vadd.f32 %v691, %v826
        %v828 = vpop.f32.mrb[0].mxu0
        %v829 = vadd.f32 %v691, %v828
        %830 = vdwg.mxu0
        %v831 = vadd.f32 %v785, %v791
        %v832 = vadd.f32 %v831, %v797
        %v833 = vadd.f32 %v832, %v803
        %v834 = vrot.slane %v833, 4
        %v835 = vadd.f32 %v833, %v834
        %v836 = vrot.slane %v835, 2
        %v837 = vadd.f32 %v835, %v836
        %v838 = vrot.slane %v837, 1
        %v839 = vadd.f32 %v837, %v838
        %v840 = vadd.f32 %v787, %v793
        %v841 = vadd.f32 %v840, %v799
        %v842 = vadd.f32 %v841, %v805
        %v843 = vrot.slane %v842, 4
        %v844 = vadd.f32 %v842, %v843
        %v845 = vrot.slane %v844, 2
        %v846 = vadd.f32 %v844, %v845
        %v847 = vrot.slane %v846, 1
        %v848 = vadd.f32 %v846, %v847
        %v849 = vrcp.pop 32.0
        %v850 = vmul.f32 %v839, %v849
        %v851 = vmul.f32 %v848, %v849
        %v852 = vsub.f32 %v785, %v850
        %v853 = vsub.f32 %v787, %v851
        %v854 = vsub.f32 %v791, %v850
        %v855 = vsub.f32 %v793, %v851
        %v856 = vsub.f32 %v797, %v850
        %v857 = vsub.f32 %v799, %v851
        %v858 = vsub.f32 %v803, %v850
        %v859 = vsub.f32 %v805, %v851
        %v860 = vmul.f32 %v852, %v852
        %v861 = vmul.f32 %v853, %v853
        %v862 = vmul.f32 %v854, %v854
        %v863 = vmul.f32 %v855, %v855
        %v864 = vmul.f32 %v856, %v856
        %v865 = vmul.f32 %v857, %v857
        %v866 = vmul.f32 %v858, %v858
        %v867 = vmul.f32 %v859, %v859
        %v868 = vadd.f32 %v860, %v862
        %v869 = vadd.f32 %v868, %v864
        %v870 = vadd.f32 %v869, %v866
        %v871 = vrot.slane %v870, 4
        %v872 = vadd.f32 %v870, %v871
        %v873 = vrot.slane %v872, 2
        %v874 = vadd.f32 %v872, %v873
        %v875 = vrot.slane %v874, 1
        %v876 = vadd.f32 %v874, %v875
        %v877 = vadd.f32 %v861, %v863
        %v878 = vadd.f32 %v877, %v865
        %v879 = vadd.f32 %v878, %v867
        %v880 = vrot.slane %v879, 4
        %v881 = vadd.f32 %v879, %v880
        %v882 = vrot.slane %v881, 2
        %v883 = vadd.f32 %v881, %v882
        %v884 = vrot.slane %v883, 1
        %v885 = vadd.f32 %v883, %v884
        %v886 = vmul.f32 %v876, %v849
        %v887 = vmul.f32 %v885, %v849
        %v888 = vadd.f32 %v886, 1e-05
        %v889 = vadd.f32 %v887, 1e-05
        %v890 = vrsqrt.pop %v888
        %v891 = vrsqrt.pop %v889
        %v892 = vmul.f32 %v852, %v890
        %v893 = vmul.f32 %v853, %v891
        %v894 = vmul.f32 %v854, %v890
        %v895 = vmul.f32 %v855, %v891
        %v896 = vmul.f32 %v856, %v890
        %v897 = vmul.f32 %v857, %v891
        %v898 = vmul.f32 %v858, %v890
        %v899 = vmul.f32 %v859, %v891
        %v900 = vadd.f32 %v809, %v815
        %v901 = vadd.f32 %v900, %v821
        %v902 = vadd.f32 %v901, %v827
        %v903 = vrot.slane %v902, 4
        %v904 = vadd.f32 %v902, %v903
        %v905 = vrot.slane %v904, 2
        %v906 = vadd.f32 %v904, %v905
        %v907 = vrot.slane %v906, 1
        %v908 = vadd.f32 %v906, %v907
        %v909 = vadd.f32 %v811, %v817
        %v910 = vadd.f32 %v909, %v823
        %v911 = vadd.f32 %v910, %v829
        %v912 = vrot.slane %v911, 4
        %v913 = vadd.f32 %v911, %v912
        %v914 = vrot.slane %v913, 2
        %v915 = vadd.f32 %v913, %v914
        %v916 = vrot.slane %v915, 1
        %v917 = vadd.f32 %v915, %v916
        %v918 = vmul.f32 %v908, %v849
        %v919 = vmul.f32 %v917, %v849
        %v920 = vsub.f32 %v809, %v918
        %v921 = vsub.f32 %v811, %v919
        %v922 = vsub.f32 %v815, %v918
        %v923 = vsub.f32 %v817, %v919
        %v924 = vsub.f32 %v821, %v918
        %v925 = vsub.f32 %v823, %v919
        %v926 = vsub.f32 %v827, %v918
        %v927 = vsub.f32 %v829, %v919
        %v928 = vmul.f32 %v920, %v920
        %v929 = vmul.f32 %v921, %v921
        %v930 = vmul.f32 %v922, %v922
        %v931 = vmul.f32 %v923, %v923
        %v932 = vmul.f32 %v924, %v924
        %v933 = vmul.f32 %v925, %v925
        %v934 = vmul.f32 %v926, %v926
        %v935 = vmul.f32 %v927, %v927
        %v936 = vadd.f32 %v928, %v930
        %v937 = vadd.f32 %v936, %v932
        %v938 = vadd.f32 %v937, %v934
        %v939 = vrot.slane %v938, 4
        %v940 = vadd.f32 %v938, %v939
        %v941 = vrot.slane %v940, 2
        %v942 = vadd.f32 %v940, %v941
        %v943 = vrot.slane %v942, 1
        %v944 = vadd.f32 %v942, %v943
        %v945 = vadd.f32 %v929, %v931
        %v946 = vadd.f32 %v945, %v933
        %v947 = vadd.f32 %v946, %v935
        %v948 = vrot.slane %v947, 4
        %v949 = vadd.f32 %v947, %v948
        %v950 = vrot.slane %v949, 2
        %v951 = vadd.f32 %v949, %v950
        %v952 = vrot.slane %v951, 1
        %v953 = vadd.f32 %v951, %v952
        %v954 = vmul.f32 %v944, %v849
        %v955 = vmul.f32 %v953, %v849
        %v956 = vadd.f32 %v954, 1e-05
        %v957 = vadd.f32 %v955, 1e-05
        %v958 = vrsqrt.pop %v956
        %v959 = vrsqrt.pop %v957
        %v960 = vmul.f32 %v920, %v958
        %v961 = vmul.f32 %v921, %v959
        %v962 = vmul.f32 %v922, %v958
        %v963 = vmul.f32 %v923, %v959
        %v964 = vmul.f32 %v924, %v958
        %v965 = vmul.f32 %v925, %v959
        %v966 = vmul.f32 %v926, %v958
        %v967 = vmul.f32 %v927, %v959
        %968 = vset.pattern.permute.xlu0 1
        %969 = vperm.xlu0 %968, %v621
        %v970 = vpop.permute.xlu0 %969
        %972 = vset.pattern.permute.xlu0 1
        %973 = vperm.xlu0 %972, %v622
        %v974 = vpop.permute.xlu0 %973
        %976 = vset.pattern.permute.xlu0 1
        %977 = vperm.xlu0 %976, %v623
        %v978 = vpop.permute.xlu0 %977
        %980 = vset.pattern.permute.xlu0 1
        %981 = vperm.xlu0 %980, %v624
        %v982 = vpop.permute.xlu0 %981
        %984 = vset.pattern.permute.xlu0 1
        %985 = vperm.xlu0 %984, %v625
        %v986 = vpop.permute.xlu0 %985
        %988 = vset.pattern.permute.xlu0 1
        %989 = vperm.xlu0 %988, %v626
        %v990 = vpop.permute.xlu0 %989
        %992 = vset.pattern.permute.xlu0 1
        %993 = vperm.xlu0 %992, %v627
        %v994 = vpop.permute.xlu0 %993
        %996 = vset.pattern.permute.xlu0 1
        %997 = vperm.xlu0 %996, %v628
        %v998 = vpop.permute.xlu0 %997
        %v1000 = vmul.f32 %v892, %v970
        %v1001 = vmul.f32 %v893, %v970
        %v1002 = vmul.f32 %v894, %v974
        %v1003 = vmul.f32 %v895, %v974
        %v1004 = vmul.f32 %v896, %v978
        %v1005 = vmul.f32 %v897, %v978
        %v1006 = vmul.f32 %v898, %v982
        %v1007 = vmul.f32 %v899, %v982
        %v1008 = vmul.f32 %v960, %v986
        %v1009 = vmul.f32 %v961, %v986
        %v1010 = vmul.f32 %v962, %v990
        %v1011 = vmul.f32 %v963, %v990
        %v1012 = vmul.f32 %v964, %v994
        %v1013 = vmul.f32 %v965, %v994
        %v1014 = vmul.f32 %v966, %v998
        %v1015 = vmul.f32 %v967, %v998
        %1016 = vset.pattern.permute.xlu0 2
        %1017 = vperm.xlu0 %1016, %v621
        %v1018 = vpop.permute.xlu0 %1017
        %1020 = vset.pattern.permute.xlu0 2
        %1021 = vperm.xlu0 %1020, %v622
        %v1022 = vpop.permute.xlu0 %1021
        %1024 = vset.pattern.permute.xlu0 2
        %1025 = vperm.xlu0 %1024, %v623
        %v1026 = vpop.permute.xlu0 %1025
        %1028 = vset.pattern.permute.xlu0 2
        %1029 = vperm.xlu0 %1028, %v624
        %v1030 = vpop.permute.xlu0 %1029
        %1032 = vset.pattern.permute.xlu0 2
        %1033 = vperm.xlu0 %1032, %v625
        %v1034 = vpop.permute.xlu0 %1033
        %1036 = vset.pattern.permute.xlu0 2
        %1037 = vperm.xlu0 %1036, %v626
        %v1038 = vpop.permute.xlu0 %1037
        %1040 = vset.pattern.permute.xlu0 2
        %1041 = vperm.xlu0 %1040, %v627
        %v1042 = vpop.permute.xlu0 %1041
        %1044 = vset.pattern.permute.xlu0 2
        %1045 = vperm.xlu0 %1044, %v628
        %v1046 = vpop.permute.xlu0 %1045
        %v1048 = vadd.f32 %v1000, %v1018
        %v1049 = vadd.f32 %v1001, %v1018
        %v1050 = vadd.f32 %v1002, %v1022
        %v1051 = vadd.f32 %v1003, %v1022
        %v1052 = vadd.f32 %v1004, %v1026
        %v1053 = vadd.f32 %v1005, %v1026
        %v1054 = vadd.f32 %v1006, %v1030
        %v1055 = vadd.f32 %v1007, %v1030
        %v1056 = vadd.f32 %v1008, %v1034
        %v1057 = vadd.f32 %v1009, %v1034
        %v1058 = vadd.f32 %v1010, %v1038
        %v1059 = vadd.f32 %v1011, %v1038
        %v1060 = vadd.f32 %v1012, %v1042
        %v1061 = vadd.f32 %v1013, %v1042
        %v1062 = vadd.f32 %v1014, %v1046
        %v1063 = vadd.f32 %v1015, %v1046
        %v1064 = vmax.f32 %v1048, 0.0
        %v1065 = vmax.f32 %v1049, 0.0
        %v1066 = vmax.f32 %v1050, 0.0
        %v1067 = vmax.f32 %v1051, 0.0
        %v1068 = vmax.f32 %v1052, 0.0
        %v1069 = vmax.f32 %v1053, 0.0
        %v1070 = vmax.f32 %v1054, 0.0
        %v1071 = vmax.f32 %v1055, 0.0
        %v1072 = vmax.f32 %v1056, 0.0
        %v1073 = vmax.f32 %v1057, 0.0
        %v1074 = vmax.f32 %v1058, 0.0
        %v1075 = vmax.f32 %v1059, 0.0
        %v1076 = vmax.f32 %v1060, 0.0
        %v1077 = vmax.f32 %v1061, 0.0
        %v1078 = vmax.f32 %v1062, 0.0
        %v1079 = vmax.f32 %v1063, 0.0
        %v1080 = vld [vmem:[%s7] sm:$0xff]
        %v1081 = vld [vmem:[%s7 + $0x8] sm:$0xff]
        %v1082 = vld [vmem:[%s7 + $0x10] sm:$0xff]
        %v1083 = vld [vmem:[%s7 + $0x18] sm:$0xff]
        %v1084 = vld [vmem:[%s7 + $0x20] sm:$0xff]
        %v1085 = vld [vmem:[%s7 + $0x28] sm:$0xff]
        %v1086 = vld [vmem:[%s7 + $0x30] sm:$0xff]
        %v1087 = vld [vmem:[%s7 + $0x38] sm:$0xff]
        %1088 = vset.pattern.permute.xlu0 3
        %1089 = vperm.xlu0 %1088, %v621
        %v1090 = vpop.permute.xlu0 %1089
        %1092 = vset.pattern.permute.xlu0 3
        %1093 = vperm.xlu0 %1092, %v622
        %v1094 = vpop.permute.xlu0 %1093
        %1096 = vset.pattern.permute.xlu0 3
        %1097 = vperm.xlu0 %1096, %v623
        %v1098 = vpop.permute.xlu0 %1097
        %1100 = vset.pattern.permute.xlu0 3
        %1101 = vperm.xlu0 %1100, %v624
        %v1102 = vpop.permute.xlu0 %1101
        %1104 = vset.pattern.permute.xlu0 3
        %1105 = vperm.xlu0 %1104, %v625
        %v1106 = vpop.permute.xlu0 %1105
        %1108 = vset.pattern.permute.xlu0 3
        %1109 = vperm.xlu0 %1108, %v626
        %v1110 = vpop.permute.xlu0 %1109
        %1112 = vset.pattern.permute.xlu0 3
        %1113 = vperm.xlu0 %1112, %v627
        %v1114 = vpop.permute.xlu0 %1113
        %1116 = vset.pattern.permute.xlu0 3
        %1117 = vperm.xlu0 %1116, %v628
        %v1118 = vpop.permute.xlu0 %1117
        %v1121 = vsel %vm693, %v1080, 0
        %v1124 = vsel %vm693, %v1081, 0
        %v1127 = vsel %vm693, %v1082, 0
        %v1130 = vsel %vm693, %v1083, 0
        %v1133 = vsel %vm693, %v1084, 0
        %v1136 = vsel %vm693, %v1085, 0
        %v1139 = vsel %vm693, %v1086, 0
        %v1142 = vsel %vm693, %v1087, 0
        %1144 = vmatprep.subr.mxu0 %v1065
        %1145 = vmatpush1.msra.mxu0 %v1064
        %1146 = vmatprep.subr.mxu0 %v1067
        %1147 = vmatpush1.msra.mxu0 %v1066
        %1148 = vmatprep.subr.mxu0 %v1069
        %1149 = vmatpush1.msra.mxu0 %v1068
        %1150 = vmatprep.subr.mxu0 %v1071
        %1151 = vmatpush1.msra.mxu0 %v1070
        %1152 = vmatprep.subr.mxu0 %v1073
        %1153 = vmatpush1.msra.mxu0 %v1072
        %1154 = vmatprep.subr.mxu0 %v1075
        %1155 = vmatpush1.msra.mxu0 %v1074
        %1156 = vmatprep.subr.mxu0 %v1077
        %1157 = vmatpush1.msra.mxu0 %v1076
        %1158 = vmatprep.subr.mxu0 %v1079
        %1159 = vmatpush1.msra.mxu0 %v1078
        %1160 = vmatprep.subr.mxu0 0.0
        %1161 = vmatpush1.msra.mxu0 0.0
        %1162 = vmatprep.subr.mxu0 0.0
        %1163 = vmatpush1.msra.mxu0 0.0
        %1164 = vmatprep.subr.mxu0 0.0
        %1165 = vmatpush1.msra.mxu0 0.0
        %1166 = vmatprep.subr.mxu0 0.0
        %1167 = vmatpush1.msra.mxu0 0.0
        %1168 = vmatprep.subr.mxu0 0.0
        %1169 = vmatpush1.msra.mxu0 0.0
        %1170 = vmatprep.subr.mxu0 0.0
        %1171 = vmatpush1.msra.mxu0 0.0
        %1172 = vmatprep.subr.mxu0 0.0
        %1173 = vmatpush1.msra.mxu0 0.0
        %1174 = vmatprep.subr.mxu0 0.0
        %1175 = vmatpush1.msra.mxu0 0.0
        %1176 = vmatprep.subr.mxu0 0.0
        %1177 = vmatpush1.msra.mxu0 0.0
        %1178 = vmatprep.subr.mxu0 0.0
        %1179 = vmatpush1.msra.mxu0 0.0
        %1180 = vmatprep.subr.mxu0 0.0
        %1181 = vmatpush1.msra.mxu0 0.0
        %1182 = vmatprep.subr.mxu0 0.0
        %1183 = vmatpush1.msra.mxu0 0.0
        %1184 = vmatprep.subr.mxu0 0.0
        %1185 = vmatpush1.msra.mxu0 0.0
        %1186 = vmatprep.subr.mxu0 0.0
        %1187 = vmatpush1.msra.mxu0 0.0
        %1188 = vmatprep.subr.mxu0 0.0
        %1189 = vmatpush1.msra.mxu0 0.0
        %1190 = vmatprep.subr.mxu0 0.0
        %1191 = vmatpush1.msra.mxu0 0.0
        %1192 = vmatprep.subr.mxu0 0.0
        %1193 = vmatpush1.msra.mxu0 0.0
        %1194 = vmatprep.subr.mxu0 0.0
        %1195 = vmatpush1.msra.mxu0 0.0
        %1196 = vmatprep.subr.mxu0 0.0
        %1197 = vmatpush1.msra.mxu0 0.0
        %1198 = vmatprep.subr.mxu0 0.0
        %1199 = vmatpush1.msra.mxu0 0.0
        %1200 = vmatprep.subr.mxu0 0.0
        %1201 = vmatpush1.msra.mxu0 0.0
        %1202 = vmatprep.subr.mxu0 0.0
        %1203 = vmatpush1.msra.mxu0 0.0
        %1204 = vmatprep.subr.mxu0 0.0
        %1205 = vmatpush1.msra.mxu0 0.0
        %1206 = vmatprep.subr.mxu0 0.0
        %1207 = vmatpush1.msra.mxu0 0.0
        %1208 = vmatprep.mubr.f32.mxu0 0.0
        %1209 = vmatmul.mubr.f32.gmra.mrb[0].mxu0 %v1121
        %v1210 = vpop.f32.mrb[0].mxu0
        %v1211 = vadd.f32 %v1090, %v1210
        %v1212 = vpop.f32.mrb[0].mxu0
        %v1213 = vadd.f32 %v1090, %v1212
        %1214 = vmatprep.mubr.f32.mxu0 0.0
        %1215 = vmatmul.mubr.f32.gmra.mrb[0].mxu0 %v1124
        %v1216 = vpop.f32.mrb[0].mxu0
        %v1217 = vadd.f32 %v1094, %v1216
        %v1218 = vpop.f32.mrb[0].mxu0
        %v1219 = vadd.f32 %v1094, %v1218
        %1220 = vmatprep.mubr.f32.mxu0 0.0
        %1221 = vmatmul.mubr.f32.gmra.mrb[0].mxu0 %v1127
        %v1222 = vpop.f32.mrb[0].mxu0
        %v1223 = vadd.f32 %v1098, %v1222
        %v1224 = vpop.f32.mrb[0].mxu0
        %v1225 = vadd.f32 %v1098, %v1224
        %1226 = vmatprep.mubr.f32.mxu0 0.0
        %1227 = vmatmul.mubr.f32.gmra.mrb[0].mxu0 %v1130
        %v1228 = vpop.f32.mrb[0].mxu0
        %v1229 = vadd.f32 %v1102, %v1228
        %v1230 = vpop.f32.mrb[0].mxu0
        %v1231 = vadd.f32 %v1102, %v1230
        %1232 = vmatprep.mubr.f32.mxu0 0.0
        %1233 = vmatmul.mubr.f32.gmra.mrb[0].mxu0 %v1133
        %v1234 = vpop.f32.mrb[0].mxu0
        %v1235 = vadd.f32 %v1106, %v1234
        %v1236 = vpop.f32.mrb[0].mxu0
        %v1237 = vadd.f32 %v1106, %v1236
        %1238 = vmatprep.mubr.f32.mxu0 0.0
        %1239 = vmatmul.mubr.f32.gmra.mrb[0].mxu0 %v1136
        %v1240 = vpop.f32.mrb[0].mxu0
        %v1241 = vadd.f32 %v1110, %v1240
        %v1242 = vpop.f32.mrb[0].mxu0
        %v1243 = vadd.f32 %v1110, %v1242
        %1244 = vmatprep.mubr.f32.mxu0 0.0
        %1245 = vmatmul.mubr.f32.gmra.mrb[0].mxu0 %v1139
        %v1246 = vpop.f32.mrb[0].mxu0
        %v1247 = vadd.f32 %v1114, %v1246
        %v1248 = vpop.f32.mrb[0].mxu0
        %v1249 = vadd.f32 %v1114, %v1248
        %1250 = vmatprep.mubr.f32.mxu0 0.0
        %1251 = vmatmul.mubr.f32.gmra.mrb[0].mxu0 %v1142
        %v1252 = vpop.f32.mrb[0].mxu0
        %v1253 = vadd.f32 %v1118, %v1252
        %v1254 = vpop.f32.mrb[0].mxu0
        %v1255 = vadd.f32 %v1118, %v1254
        %1256 = vdwg.mxu0
        %v1257 = vld [vmem:[%s514] sm:$0xff]
        %v1258 = vld [vmem:[%s514 + $0x8] sm:$0xff]
        %v1259 = vld [vmem:[%s514 + $0x10] sm:$0xff]
        %v1260 = vld [vmem:[%s514 + $0x18] sm:$0xff]
        %v1261 = vld [vmem:[%s586] sm:$0xff]
        %v1262 = vld [vmem:[%s586 + $0x8] sm:$0xff]
        %v1263 = vld [vmem:[%s8] sm:$0xff]
        %v1264 = vld [vmem:[%s8 + $0x8] sm:$0xff]
        %v1265 = vld [vmem:[%s8 + $0x10] sm:$0xff]
        %v1266 = vld [vmem:[%s8 + $0x18] sm:$0xff]
        %v1267 = vld [vmem:[%s8 + $0x20] sm:$0xff]
        %v1268 = vld [vmem:[%s8 + $0x28] sm:$0xff]
        %v1269 = vld [vmem:[%s8 + $0x30] sm:$0xff]
        %v1270 = vld [vmem:[%s8 + $0x38] sm:$0xff]
        %vm1271 = vcmask 719872
        %v1273 = vsel %vm1271, %v1263, 0
        %v1276 = vsel %vm1271, %v1264, 0
        %v1279 = vsel %vm1271, %v1265, 0
        %v1282 = vsel %vm1271, %v1266, 0
        %v1285 = vsel %vm1271, %v1267, 0
        %v1288 = vsel %vm1271, %v1268, 0
        %v1291 = vsel %vm1271, %v1269, 0
        %v1294 = vsel %vm1271, %v1270, 0
        %1296 = vmatprep.subr.mxu0 %v1258
        %1297 = vmatpush1.msra.mxu0 %v1257
        %1298 = vmatprep.subr.mxu0 %v1260
        %1299 = vmatpush1.msra.mxu0 %v1259
        %1300 = vmatprep.subr.mxu0 %v1213
        %1301 = vmatpush1.msra.mxu0 %v1211
        %1302 = vmatprep.subr.mxu0 %v1219
        %1303 = vmatpush1.msra.mxu0 %v1217
        %1304 = vmatprep.subr.mxu0 %v1225
        %1305 = vmatpush1.msra.mxu0 %v1223
        %1306 = vmatprep.subr.mxu0 %v1231
        %1307 = vmatpush1.msra.mxu0 %v1229
        %1308 = vmatprep.subr.mxu0 %v1237
        %1309 = vmatpush1.msra.mxu0 %v1235
        %1310 = vmatprep.subr.mxu0 %v1243
        %1311 = vmatpush1.msra.mxu0 %v1241
        %1312 = vmatprep.subr.mxu0 %v1249
        %1313 = vmatpush1.msra.mxu0 %v1247
        %1314 = vmatprep.subr.mxu0 %v1255
        %1315 = vmatpush1.msra.mxu0 %v1253
        %1316 = vmatprep.subr.mxu0 %v1262
        %1317 = vmatpush1.msra.mxu0 %v1261
        %1318 = vmatprep.subr.mxu0 0.0
        %1319 = vmatpush1.msra.mxu0 0.0
        %1320 = vmatprep.subr.mxu0 0.0
        %1321 = vmatpush1.msra.mxu0 0.0
        %1322 = vmatprep.subr.mxu0 0.0
        %1323 = vmatpush1.msra.mxu0 0.0
        %1324 = vmatprep.subr.mxu0 0.0
        %1325 = vmatpush1.msra.mxu0 0.0
        %1326 = vmatprep.subr.mxu0 0.0
        %1327 = vmatpush1.msra.mxu0 0.0
        %1328 = vmatprep.subr.mxu0 0.0
        %1329 = vmatpush1.msra.mxu0 0.0
        %1330 = vmatprep.subr.mxu0 0.0
        %1331 = vmatpush1.msra.mxu0 0.0
        %1332 = vmatprep.subr.mxu0 0.0
        %1333 = vmatpush1.msra.mxu0 0.0
        %1334 = vmatprep.subr.mxu0 0.0
        %1335 = vmatpush1.msra.mxu0 0.0
        %1336 = vmatprep.subr.mxu0 0.0
        %1337 = vmatpush1.msra.mxu0 0.0
        %1338 = vmatprep.subr.mxu0 0.0
        %1339 = vmatpush1.msra.mxu0 0.0
        %1340 = vmatprep.subr.mxu0 0.0
        %1341 = vmatpush1.msra.mxu0 0.0
        %1342 = vmatprep.subr.mxu0 0.0
        %1343 = vmatpush1.msra.mxu0 0.0
        %1344 = vmatprep.subr.mxu0 0.0
        %1345 = vmatpush1.msra.mxu0 0.0
        %1346 = vmatprep.subr.mxu0 0.0
        %1347 = vmatpush1.msra.mxu0 0.0
        %1348 = vmatprep.subr.mxu0 0.0
        %1349 = vmatpush1.msra.mxu0 0.0
        %1350 = vmatprep.subr.mxu0 0.0
        %1351 = vmatpush1.msra.mxu0 0.0
        %1352 = vmatprep.subr.mxu0 0.0
        %1353 = vmatpush1.msra.mxu0 0.0
        %1354 = vmatprep.subr.mxu0 0.0
        %1355 = vmatpush1.msra.mxu0 0.0
        %1356 = vmatprep.subr.mxu0 0.0
        %1357 = vmatpush1.msra.mxu0 0.0
        %1358 = vmatprep.subr.mxu0 0.0
        %1359 = vmatpush1.msra.mxu0 0.0
        %1360 = vmatprep.mubr.f32.mxu0 0.0
        %1361 = vmatmul.mubr.f32.gmra.mrb[0].mxu0 %v1273
        %v1362 = vpop.f32.mrb[0].mxu0
        %v1363 = vadd.f32 0.0, %v1362
        %v1364 = vpop.f32.mrb[0].mxu0
        %v1365 = vadd.f32 0.0, %v1364
        %1366 = vmatprep.mubr.f32.mxu0 0.0
        %1367 = vmatmul.mubr.f32.gmra.mrb[0].mxu0 %v1276
        %v1368 = vpop.f32.mrb[0].mxu0
        %v1369 = vadd.f32 0.0, %v1368
        %v1370 = vpop.f32.mrb[0].mxu0
        %v1371 = vadd.f32 0.0, %v1370
        %1372 = vmatprep.mubr.f32.mxu0 0.0
        %1373 = vmatmul.mubr.f32.gmra.mrb[0].mxu0 %v1279
        %v1374 = vpop.f32.mrb[0].mxu0
        %v1375 = vadd.f32 0.0, %v1374
        %v1376 = vpop.f32.mrb[0].mxu0
        %v1377 = vadd.f32 0.0, %v1376
        %1378 = vmatprep.mubr.f32.mxu0 0.0
        %1379 = vmatmul.mubr.f32.gmra.mrb[0].mxu0 %v1282
        %v1380 = vpop.f32.mrb[0].mxu0
        %v1381 = vadd.f32 0.0, %v1380
        %v1382 = vpop.f32.mrb[0].mxu0
        %v1383 = vadd.f32 0.0, %v1382
        %1384 = vmatprep.mubr.f32.mxu0 0.0
        %1385 = vmatmul.mubr.f32.gmra.mrb[0].mxu0 %v1285
        %v1386 = vpop.f32.mrb[0].mxu0
        %v1387 = vadd.f32 0.0, %v1386
        %v1388 = vpop.f32.mrb[0].mxu0
        %v1389 = vadd.f32 0.0, %v1388
        %1390 = vmatprep.mubr.f32.mxu0 0.0
        %1391 = vmatmul.mubr.f32.gmra.mrb[0].mxu0 %v1288
        %v1392 = vpop.f32.mrb[0].mxu0
        %v1393 = vadd.f32 0.0, %v1392
        %v1394 = vpop.f32.mrb[0].mxu0
        %v1395 = vadd.f32 0.0, %v1394
        %1396 = vmatprep.mubr.f32.mxu0 0.0
        %1397 = vmatmul.mubr.f32.gmra.mrb[0].mxu0 %v1291
        %v1398 = vpop.f32.mrb[0].mxu0
        %v1399 = vadd.f32 0.0, %v1398
        %v1400 = vpop.f32.mrb[0].mxu0
        %v1401 = vadd.f32 0.0, %v1400
        %1402 = vmatprep.mubr.f32.mxu0 0.0
        %1403 = vmatmul.mubr.f32.gmra.mrb[0].mxu0 %v1294
        %v1404 = vpop.f32.mrb[0].mxu0
        %v1405 = vadd.f32 0.0, %v1404
        %v1406 = vpop.f32.mrb[0].mxu0
        %v1407 = vadd.f32 0.0, %v1406
        %1408 = vdwg.mxu0
        %v1409 = vld [vmem:[%s9] sm:$0xff]
        %v1410 = vld [vmem:[%s9 + $0x8] sm:$0xff]
        %v1411 = vld [vmem:[%s9 + $0x10] sm:$0xff]
        %v1412 = vld [vmem:[%s9 + $0x18] sm:$0xff]
        %1413 = vset.pattern.permute.xlu0 4
        %1414 = vperm.xlu0 %1413, %v621
        %v1415 = vpop.permute.xlu0 %1414
        %1417 = vset.pattern.permute.xlu0 4
        %1418 = vperm.xlu0 %1417, %v622
        %v1419 = vpop.permute.xlu0 %1418
        %1421 = vset.pattern.permute.xlu0 4
        %1422 = vperm.xlu0 %1421, %v623
        %v1423 = vpop.permute.xlu0 %1422
        %1425 = vset.pattern.permute.xlu0 4
        %1426 = vperm.xlu0 %1425, %v624
        %v1427 = vpop.permute.xlu0 %1426
        %vm1429 = vcmask 261120
        %v1431 = vsel %vm1429, %v1409, 0
        %v1434 = vsel %vm1429, %v1410, 0
        %v1437 = vsel %vm1429, %v1411, 0
        %v1440 = vsel %vm1429, %v1412, 0
        %1442 = vmatprep.subr.mxu0 %v1365
        %1443 = vmatpush1.msra.mxu0 %v1363
        %1444 = vmatprep.subr.mxu0 %v1371
        %1445 = vmatpush1.msra.mxu0 %v1369
        %1446 = vmatprep.subr.mxu0 %v1377
        %1447 = vmatpush1.msra.mxu0 %v1375
        %1448 = vmatprep.subr.mxu0 %v1383
        %1449 = vmatpush1.msra.mxu0 %v1381
        %1450 = vmatprep.subr.mxu0 0.0
        %1451 = vmatpush1.msra.mxu0 0.0
        %1452 = vmatprep.subr.mxu0 0.0
        %1453 = vmatpush1.msra.mxu0 0.0
        %1454 = vmatprep.subr.mxu0 0.0
        %1455 = vmatpush1.msra.mxu0 0.0
        %1456 = vmatprep.subr.mxu0 0.0
        %1457 = vmatpush1.msra.mxu0 0.0
        %1458 = vmatprep.subr.mxu0 0.0
        %1459 = vmatpush1.msra.mxu0 0.0
        %1460 = vmatprep.subr.mxu0 0.0
        %1461 = vmatpush1.msra.mxu0 0.0
        %1462 = vmatprep.subr.mxu0 0.0
        %1463 = vmatpush1.msra.mxu0 0.0
        %1464 = vmatprep.subr.mxu0 0.0
        %1465 = vmatpush1.msra.mxu0 0.0
        %1466 = vmatprep.subr.mxu0 0.0
        %1467 = vmatpush1.msra.mxu0 0.0
        %1468 = vmatprep.subr.mxu0 0.0
        %1469 = vmatpush1.msra.mxu0 0.0
        %1470 = vmatprep.subr.mxu0 0.0
        %1471 = vmatpush1.msra.mxu0 0.0
        %1472 = vmatprep.subr.mxu0 0.0
        %1473 = vmatpush1.msra.mxu0 0.0
        %1474 = vmatprep.subr.mxu0 0.0
        %1475 = vmatpush1.msra.mxu0 0.0
        %1476 = vmatprep.subr.mxu0 0.0
        %1477 = vmatpush1.msra.mxu0 0.0
        %1478 = vmatprep.subr.mxu0 0.0
        %1479 = vmatpush1.msra.mxu0 0.0
        %1480 = vmatprep.subr.mxu0 0.0
        %1481 = vmatpush1.msra.mxu0 0.0
        %1482 = vmatprep.subr.mxu0 0.0
        %1483 = vmatpush1.msra.mxu0 0.0
        %1484 = vmatprep.subr.mxu0 0.0
        %1485 = vmatpush1.msra.mxu0 0.0
        %1486 = vmatprep.subr.mxu0 0.0
        %1487 = vmatpush1.msra.mxu0 0.0
        %1488 = vmatprep.subr.mxu0 0.0
        %1489 = vmatpush1.msra.mxu0 0.0
        %1490 = vmatprep.subr.mxu0 0.0
        %1491 = vmatpush1.msra.mxu0 0.0
        %1492 = vmatprep.subr.mxu0 0.0
        %1493 = vmatpush1.msra.mxu0 0.0
        %1494 = vmatprep.subr.mxu0 0.0
        %1495 = vmatpush1.msra.mxu0 0.0
        %1496 = vmatprep.subr.mxu0 0.0
        %1497 = vmatpush1.msra.mxu0 0.0
        %1498 = vmatprep.subr.mxu0 0.0
        %1499 = vmatpush1.msra.mxu0 0.0
        %1500 = vmatprep.subr.mxu0 0.0
        %1501 = vmatpush1.msra.mxu0 0.0
        %1502 = vmatprep.subr.mxu0 0.0
        %1503 = vmatpush1.msra.mxu0 0.0
        %1504 = vmatprep.subr.mxu0 0.0
        %1505 = vmatpush1.msra.mxu0 0.0
        %1506 = vmatprep.mubr.f32.mxu0 0.0
        %1507 = vmatmul.mubr.f32.gmra.mrb[0].mxu0 %v1431
        %v1508 = vpop.f32.mrb[0].mxu0
        %v1509 = vadd.f32 %v1415, %v1508
        %v1510 = vpop.f32.mrb[0].mxu0
        %v1511 = vadd.f32 %v1415, %v1510
        %1512 = vmatprep.mubr.f32.mxu0 0.0
        %1513 = vmatmul.mubr.f32.gmra.mrb[0].mxu0 %v1434
        %v1514 = vpop.f32.mrb[0].mxu0
        %v1515 = vadd.f32 %v1419, %v1514
        %v1516 = vpop.f32.mrb[0].mxu0
        %v1517 = vadd.f32 %v1419, %v1516
        %1518 = vmatprep.mubr.f32.mxu0 0.0
        %1519 = vmatmul.mubr.f32.gmra.mrb[0].mxu0 %v1437
        %v1520 = vpop.f32.mrb[0].mxu0
        %v1521 = vadd.f32 %v1423, %v1520
        %v1522 = vpop.f32.mrb[0].mxu0
        %v1523 = vadd.f32 %v1423, %v1522
        %1524 = vmatprep.mubr.f32.mxu0 0.0
        %1525 = vmatmul.mubr.f32.gmra.mrb[0].mxu0 %v1440
        %v1526 = vpop.f32.mrb[0].mxu0
        %v1527 = vadd.f32 %v1427, %v1526
        %v1528 = vpop.f32.mrb[0].mxu0
        %v1529 = vadd.f32 %v1427, %v1528
        %1530 = vdwg.mxu0
        %v1531 = vadd.f32 %v1509, %v1515
        %v1532 = vadd.f32 %v1531, %v1521
        %v1533 = vadd.f32 %v1532, %v1527
        %v1534 = vrot.slane %v1533, 4
        %v1535 = vadd.f32 %v1533, %v1534
        %v1536 = vrot.slane %v1535, 2
        %v1537 = vadd.f32 %v1535, %v1536
        %v1538 = vrot.slane %v1537, 1
        %v1539 = vadd.f32 %v1537, %v1538
        %v1540 = vadd.f32 %v1511, %v1517
        %v1541 = vadd.f32 %v1540, %v1523
        %v1542 = vadd.f32 %v1541, %v1529
        %v1543 = vrot.slane %v1542, 4
        %v1544 = vadd.f32 %v1542, %v1543
        %v1545 = vrot.slane %v1544, 2
        %v1546 = vadd.f32 %v1544, %v1545
        %v1547 = vrot.slane %v1546, 1
        %v1548 = vadd.f32 %v1546, %v1547
        %v1549 = vmul.f32 %v1539, %v849
        %v1550 = vmul.f32 %v1548, %v849
        %v1551 = vsub.f32 %v1509, %v1549
        %v1552 = vsub.f32 %v1511, %v1550
        %v1553 = vsub.f32 %v1515, %v1549
        %v1554 = vsub.f32 %v1517, %v1550
        %v1555 = vsub.f32 %v1521, %v1549
        %v1556 = vsub.f32 %v1523, %v1550
        %v1557 = vsub.f32 %v1527, %v1549
        %v1558 = vsub.f32 %v1529, %v1550
        %v1559 = vmul.f32 %v1551, %v1551
        %v1560 = vmul.f32 %v1552, %v1552
        %v1561 = vmul.f32 %v1553, %v1553
        %v1562 = vmul.f32 %v1554, %v1554
        %v1563 = vmul.f32 %v1555, %v1555
        %v1564 = vmul.f32 %v1556, %v1556
        %v1565 = vmul.f32 %v1557, %v1557
        %v1566 = vmul.f32 %v1558, %v1558
        %v1567 = vadd.f32 %v1559, %v1561
        %v1568 = vadd.f32 %v1567, %v1563
        %v1569 = vadd.f32 %v1568, %v1565
        %v1570 = vrot.slane %v1569, 4
        %v1571 = vadd.f32 %v1569, %v1570
        %v1572 = vrot.slane %v1571, 2
        %v1573 = vadd.f32 %v1571, %v1572
        %v1574 = vrot.slane %v1573, 1
        %v1575 = vadd.f32 %v1573, %v1574
        %v1576 = vadd.f32 %v1560, %v1562
        %v1577 = vadd.f32 %v1576, %v1564
        %v1578 = vadd.f32 %v1577, %v1566
        %v1579 = vrot.slane %v1578, 4
        %v1580 = vadd.f32 %v1578, %v1579
        %v1581 = vrot.slane %v1580, 2
        %v1582 = vadd.f32 %v1580, %v1581
        %v1583 = vrot.slane %v1582, 1
        %v1584 = vadd.f32 %v1582, %v1583
        %v1585 = vmul.f32 %v1575, %v849
        %v1586 = vmul.f32 %v1584, %v849
        %v1587 = vadd.f32 %v1585, 1e-05
        %v1588 = vadd.f32 %v1586, 1e-05
        %v1589 = vrsqrt.pop %v1587
        %v1590 = vrsqrt.pop %v1588
        %v1591 = vmul.f32 %v1551, %v1589
        %v1592 = vmul.f32 %v1552, %v1590
        %v1593 = vmul.f32 %v1553, %v1589
        %v1594 = vmul.f32 %v1554, %v1590
        %v1595 = vmul.f32 %v1555, %v1589
        %v1596 = vmul.f32 %v1556, %v1590
        %v1597 = vmul.f32 %v1557, %v1589
        %v1598 = vmul.f32 %v1558, %v1590
        %1599 = vset.pattern.permute.xlu0 5
        %1600 = vperm.xlu0 %1599, %v621
        %v1601 = vpop.permute.xlu0 %1600
        %1603 = vset.pattern.permute.xlu0 5
        %1604 = vperm.xlu0 %1603, %v622
        %v1605 = vpop.permute.xlu0 %1604
        %1607 = vset.pattern.permute.xlu0 5
        %1608 = vperm.xlu0 %1607, %v623
        %v1609 = vpop.permute.xlu0 %1608
        %1611 = vset.pattern.permute.xlu0 5
        %1612 = vperm.xlu0 %1611, %v624
        %v1613 = vpop.permute.xlu0 %1612
        %v1615 = vmul.f32 %v1591, %v1601
        %v1616 = vmul.f32 %v1592, %v1601
        %v1617 = vmul.f32 %v1593, %v1605
        %v1618 = vmul.f32 %v1594, %v1605
        %v1619 = vmul.f32 %v1595, %v1609
        %v1620 = vmul.f32 %v1596, %v1609
        %v1621 = vmul.f32 %v1597, %v1613
        %v1622 = vmul.f32 %v1598, %v1613
        %1623 = vset.pattern.permute.xlu0 6
        %1624 = vperm.xlu0 %1623, %v621
        %v1625 = vpop.permute.xlu0 %1624
        %1627 = vset.pattern.permute.xlu0 6
        %1628 = vperm.xlu0 %1627, %v622
        %v1629 = vpop.permute.xlu0 %1628
        %1631 = vset.pattern.permute.xlu0 6
        %1632 = vperm.xlu0 %1631, %v623
        %v1633 = vpop.permute.xlu0 %1632
        %1635 = vset.pattern.permute.xlu0 6
        %1636 = vperm.xlu0 %1635, %v624
        %v1637 = vpop.permute.xlu0 %1636
        %v1639 = vadd.f32 %v1615, %v1625
        %v1640 = vadd.f32 %v1616, %v1625
        %v1641 = vadd.f32 %v1617, %v1629
        %v1642 = vadd.f32 %v1618, %v1629
        %v1643 = vadd.f32 %v1619, %v1633
        %v1644 = vadd.f32 %v1620, %v1633
        %v1645 = vadd.f32 %v1621, %v1637
        %v1646 = vadd.f32 %v1622, %v1637
        %v1647 = vmax.f32 %v1639, 0.0
        %v1648 = vmax.f32 %v1640, 0.0
        %v1649 = vmax.f32 %v1641, 0.0
        %v1650 = vmax.f32 %v1642, 0.0
        %v1651 = vmax.f32 %v1643, 0.0
        %v1652 = vmax.f32 %v1644, 0.0
        %v1653 = vmax.f32 %v1645, 0.0
        %v1654 = vmax.f32 %v1646, 0.0
        %1655 = vset.pattern.permute.xlu0 7
        %1656 = vperm.xlu0 %1655, %v621
        %v1657 = vpop.permute.xlu0 %1656
        %1659 = vset.pattern.permute.xlu0 7
        %1660 = vperm.xlu0 %1659, %v622
        %v1661 = vpop.permute.xlu0 %1660
        %1663 = vset.pattern.permute.xlu0 7
        %1664 = vperm.xlu0 %1663, %v623
        %v1665 = vpop.permute.xlu0 %1664
        %1667 = vset.pattern.permute.xlu0 7
        %1668 = vperm.xlu0 %1667, %v624
        %v1669 = vpop.permute.xlu0 %1668
        %v1671 = vmul.f32 %v1647, %v1657
        %v1672 = vmul.f32 %v1648, %v1657
        %v1673 = vmul.f32 %v1649, %v1661
        %v1674 = vmul.f32 %v1650, %v1661
        %v1675 = vmul.f32 %v1651, %v1665
        %v1676 = vmul.f32 %v1652, %v1665
        %v1677 = vmul.f32 %v1653, %v1669
        %v1678 = vmul.f32 %v1654, %v1669
        %v1679 = vadd.f32 %v1671, %v1673
        %v1680 = vadd.f32 %v1679, %v1675
        %v1681 = vadd.f32 %v1680, %v1677
        %v1682 = vrot.slane %v1681, 4
        %v1683 = vadd.f32 %v1681, %v1682
        %v1684 = vrot.slane %v1683, 2
        %v1685 = vadd.f32 %v1683, %v1684
        %v1686 = vrot.slane %v1685, 1
        %v1687 = vadd.f32 %v1685, %v1686
        %v1688 = vadd.f32 %v1672, %v1674
        %v1689 = vadd.f32 %v1688, %v1676
        %v1690 = vadd.f32 %v1689, %v1678
        %v1691 = vrot.slane %v1690, 4
        %v1692 = vadd.f32 %v1690, %v1691
        %v1693 = vrot.slane %v1692, 2
        %v1694 = vadd.f32 %v1692, %v1693
        %v1695 = vrot.slane %v1694, 1
        %v1696 = vadd.f32 %v1694, %v1695
        %1697 = vset.pattern.permute.xlu0 8
        %1698 = vperm.xlu0 %1697, %v621
        %v1699 = vpop.permute.xlu0 %1698
        %v1701 = vadd.f32 %v1687, %v1699
        %v1702 = vadd.f32 %v1696, %v1699
        %1703 = vset.pattern.permute.xlu0 9
        %1704 = vperm.xlu0 %1703, %v621
        %v1705 = vpop.permute.xlu0 %1704
        %1707 = vset.pattern.permute.xlu0 9
        %1708 = vperm.xlu0 %1707, %v622
        %v1709 = vpop.permute.xlu0 %1708
        %1711 = vset.pattern.permute.xlu0 9
        %1712 = vperm.xlu0 %1711, %v623
        %v1713 = vpop.permute.xlu0 %1712
        %1715 = vset.pattern.permute.xlu0 9
        %1716 = vperm.xlu0 %1715, %v624
        %v1717 = vpop.permute.xlu0 %1716
        %v1719 = vadd.f32 %v1387, %v1705
        %v1720 = vadd.f32 %v1389, %v1705
        %v1721 = vadd.f32 %v1393, %v1709
        %v1722 = vadd.f32 %v1395, %v1709
        %v1723 = vadd.f32 %v1399, %v1713
        %v1724 = vadd.f32 %v1401, %v1713
        %v1725 = vadd.f32 %v1405, %v1717
        %v1726 = vadd.f32 %v1407, %v1717
        %v1727 = vadd.f32 %v1719, %v1721
        %v1728 = vadd.f32 %v1727, %v1723
        %v1729 = vadd.f32 %v1728, %v1725
        %v1730 = vrot.slane %v1729, 4
        %v1731 = vadd.f32 %v1729, %v1730
        %v1732 = vrot.slane %v1731, 2
        %v1733 = vadd.f32 %v1731, %v1732
        %v1734 = vrot.slane %v1733, 1
        %v1735 = vadd.f32 %v1733, %v1734
        %v1736 = vadd.f32 %v1720, %v1722
        %v1737 = vadd.f32 %v1736, %v1724
        %v1738 = vadd.f32 %v1737, %v1726
        %v1739 = vrot.slane %v1738, 4
        %v1740 = vadd.f32 %v1738, %v1739
        %v1741 = vrot.slane %v1740, 2
        %v1742 = vadd.f32 %v1740, %v1741
        %v1743 = vrot.slane %v1742, 1
        %v1744 = vadd.f32 %v1742, %v1743
        %v1745 = vmul.f32 %v1735, %v849
        %v1746 = vmul.f32 %v1744, %v849
        %v1747 = vsub.f32 %v1719, %v1745
        %v1748 = vsub.f32 %v1720, %v1746
        %v1749 = vsub.f32 %v1721, %v1745
        %v1750 = vsub.f32 %v1722, %v1746
        %v1751 = vsub.f32 %v1723, %v1745
        %v1752 = vsub.f32 %v1724, %v1746
        %v1753 = vsub.f32 %v1725, %v1745
        %v1754 = vsub.f32 %v1726, %v1746
        %v1755 = vmul.f32 %v1747, %v1747
        %v1756 = vmul.f32 %v1748, %v1748
        %v1757 = vmul.f32 %v1749, %v1749
        %v1758 = vmul.f32 %v1750, %v1750
        %v1759 = vmul.f32 %v1751, %v1751
        %v1760 = vmul.f32 %v1752, %v1752
        %v1761 = vmul.f32 %v1753, %v1753
        %v1762 = vmul.f32 %v1754, %v1754
        %v1763 = vadd.f32 %v1755, %v1757
        %v1764 = vadd.f32 %v1763, %v1759
        %v1765 = vadd.f32 %v1764, %v1761
        %v1766 = vrot.slane %v1765, 4
        %v1767 = vadd.f32 %v1765, %v1766
        %v1768 = vrot.slane %v1767, 2
        %v1769 = vadd.f32 %v1767, %v1768
        %v1770 = vrot.slane %v1769, 1
        %v1771 = vadd.f32 %v1769, %v1770
        %v1772 = vadd.f32 %v1756, %v1758
        %v1773 = vadd.f32 %v1772, %v1760
        %v1774 = vadd.f32 %v1773, %v1762
        %v1775 = vrot.slane %v1774, 4
        %v1776 = vadd.f32 %v1774, %v1775
        %v1777 = vrot.slane %v1776, 2
        %v1778 = vadd.f32 %v1776, %v1777
        %v1779 = vrot.slane %v1778, 1
        %v1780 = vadd.f32 %v1778, %v1779
        %v1781 = vmul.f32 %v1771, %v849
        %v1782 = vmul.f32 %v1780, %v849
        %v1783 = vadd.f32 %v1781, 1e-05
        %v1784 = vadd.f32 %v1782, 1e-05
        %v1785 = vrsqrt.pop %v1783
        %v1786 = vrsqrt.pop %v1784
        %v1787 = vmul.f32 %v1747, %v1785
        %v1788 = vmul.f32 %v1748, %v1786
        %v1789 = vmul.f32 %v1749, %v1785
        %v1790 = vmul.f32 %v1750, %v1786
        %v1791 = vmul.f32 %v1751, %v1785
        %v1792 = vmul.f32 %v1752, %v1786
        %v1793 = vmul.f32 %v1753, %v1785
        %v1794 = vmul.f32 %v1754, %v1786
        %1795 = vset.pattern.permute.xlu0 10
        %1796 = vperm.xlu0 %1795, %v621
        %v1797 = vpop.permute.xlu0 %1796
        %1799 = vset.pattern.permute.xlu0 10
        %1800 = vperm.xlu0 %1799, %v622
        %v1801 = vpop.permute.xlu0 %1800
        %1803 = vset.pattern.permute.xlu0 10
        %1804 = vperm.xlu0 %1803, %v623
        %v1805 = vpop.permute.xlu0 %1804
        %1807 = vset.pattern.permute.xlu0 10
        %1808 = vperm.xlu0 %1807, %v624
        %v1809 = vpop.permute.xlu0 %1808
        %v1811 = vmul.f32 %v1787, %v1797
        %v1812 = vmul.f32 %v1788, %v1797
        %v1813 = vmul.f32 %v1789, %v1801
        %v1814 = vmul.f32 %v1790, %v1801
        %v1815 = vmul.f32 %v1791, %v1805
        %v1816 = vmul.f32 %v1792, %v1805
        %v1817 = vmul.f32 %v1793, %v1809
        %v1818 = vmul.f32 %v1794, %v1809
        %1819 = vset.pattern.permute.xlu0 11
        %1820 = vperm.xlu0 %1819, %v621
        %v1821 = vpop.permute.xlu0 %1820
        %1823 = vset.pattern.permute.xlu0 11
        %1824 = vperm.xlu0 %1823, %v622
        %v1825 = vpop.permute.xlu0 %1824
        %1827 = vset.pattern.permute.xlu0 11
        %1828 = vperm.xlu0 %1827, %v623
        %v1829 = vpop.permute.xlu0 %1828
        %1831 = vset.pattern.permute.xlu0 11
        %1832 = vperm.xlu0 %1831, %v624
        %v1833 = vpop.permute.xlu0 %1832
        %v1835 = vadd.f32 %v1811, %v1821
        %v1836 = vadd.f32 %v1812, %v1821
        %v1837 = vadd.f32 %v1813, %v1825
        %v1838 = vadd.f32 %v1814, %v1825
        %v1839 = vadd.f32 %v1815, %v1829
        %v1840 = vadd.f32 %v1816, %v1829
        %v1841 = vadd.f32 %v1817, %v1833
        %v1842 = vadd.f32 %v1818, %v1833
        %v1843 = vmax.f32 %v1835, 0.0
        %v1844 = vmax.f32 %v1836, 0.0
        %v1845 = vmax.f32 %v1837, 0.0
        %v1846 = vmax.f32 %v1838, 0.0
        %v1847 = vmax.f32 %v1839, 0.0
        %v1848 = vmax.f32 %v1840, 0.0
        %v1849 = vmax.f32 %v1841, 0.0
        %v1850 = vmax.f32 %v1842, 0.0
        %1851 = vset.pattern.permute.xlu0 12
        %1852 = vperm.xlu0 %1851, %v621
        %v1853 = vpop.permute.xlu0 %1852
        %1855 = vset.pattern.permute.xlu0 12
        %1856 = vperm.xlu0 %1855, %v622
        %v1857 = vpop.permute.xlu0 %1856
        %1859 = vset.pattern.permute.xlu0 12
        %1860 = vperm.xlu0 %1859, %v623
        %v1861 = vpop.permute.xlu0 %1860
        %1863 = vset.pattern.permute.xlu0 12
        %1864 = vperm.xlu0 %1863, %v624
        %v1865 = vpop.permute.xlu0 %1864
        %v1867 = vmul.f32 %v1843, %v1853
        %v1868 = vmul.f32 %v1844, %v1853
        %v1869 = vmul.f32 %v1845, %v1857
        %v1870 = vmul.f32 %v1846, %v1857
        %v1871 = vmul.f32 %v1847, %v1861
        %v1872 = vmul.f32 %v1848, %v1861
        %v1873 = vmul.f32 %v1849, %v1865
        %v1874 = vmul.f32 %v1850, %v1865
        %v1875 = vadd.f32 %v1867, %v1869
        %v1876 = vadd.f32 %v1875, %v1871
        %v1877 = vadd.f32 %v1876, %v1873
        %v1878 = vrot.slane %v1877, 4
        %v1879 = vadd.f32 %v1877, %v1878
        %v1880 = vrot.slane %v1879, 2
        %v1881 = vadd.f32 %v1879, %v1880
        %v1882 = vrot.slane %v1881, 1
        %v1883 = vadd.f32 %v1881, %v1882
        %v1884 = vadd.f32 %v1868, %v1870
        %v1885 = vadd.f32 %v1884, %v1872
        %v1886 = vadd.f32 %v1885, %v1874
        %v1887 = vrot.slane %v1886, 4
        %v1888 = vadd.f32 %v1886, %v1887
        %v1889 = vrot.slane %v1888, 2
        %v1890 = vadd.f32 %v1888, %v1889
        %v1891 = vrot.slane %v1890, 1
        %v1892 = vadd.f32 %v1890, %v1891
        %1893 = vset.pattern.permute.xlu0 13
        %1894 = vperm.xlu0 %1893, %v621
        %v1895 = vpop.permute.xlu0 %1894
        %v1897 = vadd.f32 %v1883, %v1895
        %v1898 = vadd.f32 %v1892, %v1895
        %v1899 = vxor.u32 %v1897, 2147483648
        %v1900 = vxor.u32 %v1898, 2147483648
        %v1901 = vmul.f32 %v1899, 1.442695
        %v1902 = vpow.pop %v1901
        %v1903 = vmul.f32 %v1900, 1.442695
        %v1904 = vpow.pop %v1903
        %v1905 = vadd.f32 %v1902, 1.0
        %v1906 = vadd.f32 %v1904, 1.0
        %v1907 = vrcp.pop %v1905
        %v1908 = vmul.f32 1.0, %v1907
        %v1909 = vrcp.pop %v1906
        %v1910 = vmul.f32 1.0, %v1909
        %v1911 = vmul.f32 %v1701, %v1908
        %v1912 = vmul.f32 %v1702, %v1910
        %v1913 = vld [vmem:[%s601] sm:$0x3]
        %v1914 = vadd.f32 %v1913, 1e-06
        %v1915 = vadd.f32 %v1913, 5.0
        %v1916 = vmul.f32 %v1914, %v1915
        %v1917 = vrcp.pop %v1916
        %v1918 = vmul.f32 5.0, %v1917
        %v1919 = vld [vmem:[%s594] sm:$0x77]
        %v1921 = vlaneseq
        %v1922 = vshrl.u32 %v1921, 7
        %v1923 = vsub.s32 0, %v1922
        %v1924 = vrot.slane %v1918, %v1923
        %v1925 = vlaneseq
        %v1926 = vshrl.u32 %v1925, 7
        %v1927 = vsub.s32 1, %v1926
        %v1928 = vrot.slane %v1918, %v1927
        %v1931 = vmul.f32 %v1911, %v1924
        %v1932 = vmul.f32 %v1912, %v1928
        %v1933 = vlaneseq
        %v1934 = vshrl.u32 %v1933, 7
        %v1935 = vsub.s32 0, %v1934
        %v1936 = vrot.slane %v1931, %v1935
        %v1937 = vlaneseq
        %v1938 = vshrl.u32 %v1937, 7
        %v1939 = vsub.s32 0, %v1938
        %v1940 = vrot.slane %v1932, %v1939
        %v1943 = vcombine.low %v1936, %v1940
        %v1945 = vmul.f32 %v1919, %v1943
        %v1946 = vlaneseq
        %v1947 = vand.u32 %v1946, 127
        %v1948 = vld [vmem:[%s609] sm:$0xff]
        %v1949 = vld [vmem:[%s609 + $0x8] sm:$0xff]
        %v1950 = vld [vmem:[%s609 + $0x10] sm:$0xff]
        %v1951 = vld [vmem:[%s609 + $0x18] sm:$0xff]
        %v1952 = vld [vmem:[%s609 + $0x20] sm:$0xff]
        %v1953 = vld [vmem:[%s609 + $0x28] sm:$0xff]
        %v1954 = vld [vmem:[%s609 + $0x30] sm:$0xff]
        %v1955 = vld [vmem:[%s609 + $0x38] sm:$0xff]
        %v1956 = vld [vmem:[%s609 + $0x40] sm:$0xff]
        %v1957 = vld [vmem:[%s609 + $0x48] sm:$0xff]
        %v1958 = vld [vmem:[%s609 + $0x50] sm:$0xff]
        %v1959 = vld [vmem:[%s609 + $0x58] sm:$0xff]
        %v1960 = vld [vmem:[%s609 + $0x60] sm:$0xff]
        %v1961 = vld [vmem:[%s609 + $0x68] sm:$0xff]
        %v1962 = vld [vmem:[%s609 + $0x70] sm:$0xff]
        %v1963 = vld [vmem:[%s609 + $0x78] sm:$0xff]
        %v1964 = vld [vmem:[%s609 + $0x80] sm:$0xff]
        %v1965 = vld [vmem:[%s609 + $0x88] sm:$0xff]
        %v1966 = vld [vmem:[%s609 + $0x90] sm:$0xff]
        %v1967 = vld [vmem:[%s609 + $0x98] sm:$0xff]
        %v1968 = vld [vmem:[%s609 + $0xa0] sm:$0xff]
        %v1969 = vld [vmem:[%s609 + $0xa8] sm:$0xff]
        %v1970 = vld [vmem:[%s609 + $0xb0] sm:$0xff]
        %v1971 = vld [vmem:[%s609 + $0xb8] sm:$0xff]
        %v1972 = vld [vmem:[%s609 + $0xc0] sm:$0xff]
        %v1973 = vld [vmem:[%s609 + $0xc8] sm:$0xff]
        %v1974 = vld [vmem:[%s609 + $0xd0] sm:$0xff]
        %v1975 = vld [vmem:[%s609 + $0xd8] sm:$0xff]
        %v1976 = vld [vmem:[%s609 + $0xe0] sm:$0xff]
        %v1977 = vld [vmem:[%s609 + $0xe8] sm:$0xff]
        %v1978 = vld [vmem:[%s609 + $0xf0] sm:$0xff]
        %v1979 = vld [vmem:[%s609 + $0xf8] sm:$0xff]
        %1980 = vset.pattern.permute.xlu0 0
        %1981 = vperm.xlu0 %1980, %v1948
        %v1982 = vpop.permute.xlu0 %1981
        %1983 = vset.pattern.permute.xlu0 0
        %1984 = vperm.xlu0 %1983, %v1949
        %v1985 = vpop.permute.xlu0 %1984
        %1986 = vset.pattern.permute.xlu0 0
        %1987 = vperm.xlu0 %1986, %v1950
        %v1988 = vpop.permute.xlu0 %1987
        %1989 = vset.pattern.permute.xlu0 0
        %1990 = vperm.xlu0 %1989, %v1951
        %v1991 = vpop.permute.xlu0 %1990
        %1992 = vset.pattern.permute.xlu0 0
        %1993 = vperm.xlu0 %1992, %v1952
        %v1994 = vpop.permute.xlu0 %1993
        %1995 = vset.pattern.permute.xlu0 0
        %1996 = vperm.xlu0 %1995, %v1953
        %v1997 = vpop.permute.xlu0 %1996
        %1998 = vset.pattern.permute.xlu0 0
        %1999 = vperm.xlu0 %1998, %v1954
        %v2000 = vpop.permute.xlu0 %1999
        %2001 = vset.pattern.permute.xlu0 0
        %2002 = vperm.xlu0 %2001, %v1955
        %v2003 = vpop.permute.xlu0 %2002
        %2004 = vset.pattern.permute.xlu0 0
        %2005 = vperm.xlu0 %2004, %v1956
        %v2006 = vpop.permute.xlu0 %2005
        %2007 = vset.pattern.permute.xlu0 0
        %2008 = vperm.xlu0 %2007, %v1957
        %v2009 = vpop.permute.xlu0 %2008
        %2010 = vset.pattern.permute.xlu0 0
        %2011 = vperm.xlu0 %2010, %v1958
        %v2012 = vpop.permute.xlu0 %2011
        %2013 = vset.pattern.permute.xlu0 0
        %2014 = vperm.xlu0 %2013, %v1959
        %v2015 = vpop.permute.xlu0 %2014
        %2016 = vset.pattern.permute.xlu0 0
        %2017 = vperm.xlu0 %2016, %v1960
        %v2018 = vpop.permute.xlu0 %2017
        %2019 = vset.pattern.permute.xlu0 0
        %2020 = vperm.xlu0 %2019, %v1961
        %v2021 = vpop.permute.xlu0 %2020
        %2022 = vset.pattern.permute.xlu0 0
        %2023 = vperm.xlu0 %2022, %v1962
        %v2024 = vpop.permute.xlu0 %2023
        %2025 = vset.pattern.permute.xlu0 0
        %2026 = vperm.xlu0 %2025, %v1963
        %v2027 = vpop.permute.xlu0 %2026
        %2028 = vset.pattern.permute.xlu0 0
        %2029 = vperm.xlu0 %2028, %v1964
        %v2030 = vpop.permute.xlu0 %2029
        %2031 = vset.pattern.permute.xlu0 0
        %2032 = vperm.xlu0 %2031, %v1965
        %v2033 = vpop.permute.xlu0 %2032
        %2034 = vset.pattern.permute.xlu0 0
        %2035 = vperm.xlu0 %2034, %v1966
        %v2036 = vpop.permute.xlu0 %2035
        %2037 = vset.pattern.permute.xlu0 0
        %2038 = vperm.xlu0 %2037, %v1967
        %v2039 = vpop.permute.xlu0 %2038
        %2040 = vset.pattern.permute.xlu0 0
        %2041 = vperm.xlu0 %2040, %v1968
        %v2042 = vpop.permute.xlu0 %2041
        %2043 = vset.pattern.permute.xlu0 0
        %2044 = vperm.xlu0 %2043, %v1969
        %v2045 = vpop.permute.xlu0 %2044
        %2046 = vset.pattern.permute.xlu0 0
        %2047 = vperm.xlu0 %2046, %v1970
        %v2048 = vpop.permute.xlu0 %2047
        %2049 = vset.pattern.permute.xlu0 0
        %2050 = vperm.xlu0 %2049, %v1971
        %v2051 = vpop.permute.xlu0 %2050
        %2052 = vset.pattern.permute.xlu0 0
        %2053 = vperm.xlu0 %2052, %v1972
        %v2054 = vpop.permute.xlu0 %2053
        %2055 = vset.pattern.permute.xlu0 0
        %2056 = vperm.xlu0 %2055, %v1973
        %v2057 = vpop.permute.xlu0 %2056
        %2058 = vset.pattern.permute.xlu0 0
        %2059 = vperm.xlu0 %2058, %v1974
        %v2060 = vpop.permute.xlu0 %2059
        %2061 = vset.pattern.permute.xlu0 0
        %2062 = vperm.xlu0 %2061, %v1975
        %v2063 = vpop.permute.xlu0 %2062
        %2064 = vset.pattern.permute.xlu0 0
        %2065 = vperm.xlu0 %2064, %v1976
        %v2066 = vpop.permute.xlu0 %2065
        %2067 = vset.pattern.permute.xlu0 0
        %2068 = vperm.xlu0 %2067, %v1977
        %v2069 = vpop.permute.xlu0 %2068
        %2070 = vset.pattern.permute.xlu0 0
        %2071 = vperm.xlu0 %2070, %v1978
        %v2072 = vpop.permute.xlu0 %2071
        %2073 = vset.pattern.permute.xlu0 0
        %2074 = vperm.xlu0 %2073, %v1979
        %v2075 = vpop.permute.xlu0 %2074
        %vm2076 = vcmp.eq.s32.totalorder %v1947, %v1982
        %vm2077 = vcmp.eq.s32.totalorder %v1947, %v1985
        %vm2078 = vcmp.eq.s32.totalorder %v1947, %v1988
        %vm2079 = vcmp.eq.s32.totalorder %v1947, %v1991
        %vm2080 = vcmp.eq.s32.totalorder %v1947, %v1994
        %vm2081 = vcmp.eq.s32.totalorder %v1947, %v1997
        %vm2082 = vcmp.eq.s32.totalorder %v1947, %v2000
        %vm2083 = vcmp.eq.s32.totalorder %v1947, %v2003
        %vm2084 = vcmp.eq.s32.totalorder %v1947, %v2006
        %vm2085 = vcmp.eq.s32.totalorder %v1947, %v2009
        %vm2086 = vcmp.eq.s32.totalorder %v1947, %v2012
        %vm2087 = vcmp.eq.s32.totalorder %v1947, %v2015
        %vm2088 = vcmp.eq.s32.totalorder %v1947, %v2018
        %vm2089 = vcmp.eq.s32.totalorder %v1947, %v2021
        %vm2090 = vcmp.eq.s32.totalorder %v1947, %v2024
        %vm2091 = vcmp.eq.s32.totalorder %v1947, %v2027
        %vm2092 = vcmp.eq.s32.totalorder %v1947, %v2030
        %vm2093 = vcmp.eq.s32.totalorder %v1947, %v2033
        %vm2094 = vcmp.eq.s32.totalorder %v1947, %v2036
        %vm2095 = vcmp.eq.s32.totalorder %v1947, %v2039
        %vm2096 = vcmp.eq.s32.totalorder %v1947, %v2042
        %vm2097 = vcmp.eq.s32.totalorder %v1947, %v2045
        %vm2098 = vcmp.eq.s32.totalorder %v1947, %v2048
        %vm2099 = vcmp.eq.s32.totalorder %v1947, %v2051
        %vm2100 = vcmp.eq.s32.totalorder %v1947, %v2054
        %vm2101 = vcmp.eq.s32.totalorder %v1947, %v2057
        %vm2102 = vcmp.eq.s32.totalorder %v1947, %v2060
        %vm2103 = vcmp.eq.s32.totalorder %v1947, %v2063
        %vm2104 = vcmp.eq.s32.totalorder %v1947, %v2066
        %vm2105 = vcmp.eq.s32.totalorder %v1947, %v2069
        %vm2106 = vcmp.eq.s32.totalorder %v1947, %v2072
        %vm2107 = vcmp.eq.s32.totalorder %v1947, %v2075
        %v2108 = vsel %vm2076, 1, 0
        %v2109 = vsel %vm2077, 1, 0
        %v2110 = vsel %vm2078, 1, 0
        %v2111 = vsel %vm2079, 1, 0
        %v2112 = vsel %vm2080, 1, 0
        %v2113 = vsel %vm2081, 1, 0
        %v2114 = vsel %vm2082, 1, 0
        %v2115 = vsel %vm2083, 1, 0
        %v2116 = vsel %vm2084, 1, 0
        %v2117 = vsel %vm2085, 1, 0
        %v2118 = vsel %vm2086, 1, 0
        %v2119 = vsel %vm2087, 1, 0
        %v2120 = vsel %vm2088, 1, 0
        %v2121 = vsel %vm2089, 1, 0
        %v2122 = vsel %vm2090, 1, 0
        %v2123 = vsel %vm2091, 1, 0
        %v2124 = vsel %vm2092, 1, 0
        %v2125 = vsel %vm2093, 1, 0
        %v2126 = vsel %vm2094, 1, 0
        %v2127 = vsel %vm2095, 1, 0
        %v2128 = vsel %vm2096, 1, 0
        %v2129 = vsel %vm2097, 1, 0
        %v2130 = vsel %vm2098, 1, 0
        %v2131 = vsel %vm2099, 1, 0
        %v2132 = vsel %vm2100, 1, 0
        %v2133 = vsel %vm2101, 1, 0
        %v2134 = vsel %vm2102, 1, 0
        %v2135 = vsel %vm2103, 1, 0
        %v2136 = vsel %vm2104, 1, 0
        %v2137 = vsel %vm2105, 1, 0
        %v2138 = vsel %vm2106, 1, 0
        %v2139 = vsel %vm2107, 1, 0
        %v2140 = vcvt.s32.f32 %v2108
        %v2141 = vcvt.s32.f32 %v2109
        %v2142 = vcvt.s32.f32 %v2110
        %v2143 = vcvt.s32.f32 %v2111
        %v2144 = vcvt.s32.f32 %v2112
        %v2145 = vcvt.s32.f32 %v2113
        %v2146 = vcvt.s32.f32 %v2114
        %v2147 = vcvt.s32.f32 %v2115
        %v2148 = vcvt.s32.f32 %v2116
        %v2149 = vcvt.s32.f32 %v2117
        %v2150 = vcvt.s32.f32 %v2118
        %v2151 = vcvt.s32.f32 %v2119
        %v2152 = vcvt.s32.f32 %v2120
        %v2153 = vcvt.s32.f32 %v2121
        %v2154 = vcvt.s32.f32 %v2122
        %v2155 = vcvt.s32.f32 %v2123
        %v2156 = vcvt.s32.f32 %v2124
        %v2157 = vcvt.s32.f32 %v2125
        %v2158 = vcvt.s32.f32 %v2126
        %v2159 = vcvt.s32.f32 %v2127
        %v2160 = vcvt.s32.f32 %v2128
        %v2161 = vcvt.s32.f32 %v2129
        %v2162 = vcvt.s32.f32 %v2130
        %v2163 = vcvt.s32.f32 %v2131
        %v2164 = vcvt.s32.f32 %v2132
        %v2165 = vcvt.s32.f32 %v2133
        %v2166 = vcvt.s32.f32 %v2134
        %v2167 = vcvt.s32.f32 %v2135
        %v2168 = vcvt.s32.f32 %v2136
        %v2169 = vcvt.s32.f32 %v2137
        %v2170 = vcvt.s32.f32 %v2138
        %v2171 = vcvt.s32.f32 %v2139
        %v2172 = vld [vmem:[%s615] sm:$0x7]
        %v2174 = vcombine.high %v1945, %v1945
        %2176 = vmatprep.subr.mxu0 0.0
        %2177 = vmatpush1.msra.mxu0 %v2140
        %2178 = vmatprep.subr.mxu0 0.0
        %2179 = vmatpush1.msra.mxu0 %v2141
        %2180 = vmatprep.subr.mxu0 0.0
        %2181 = vmatpush1.msra.mxu0 %v2142
        %2182 = vmatprep.subr.mxu0 0.0
        %2183 = vmatpush1.msra.mxu0 %v2143
        %2184 = vmatprep.subr.mxu0 0.0
        %2185 = vmatpush1.msra.mxu0 %v2144
        %2186 = vmatprep.subr.mxu0 0.0
        %2187 = vmatpush1.msra.mxu0 %v2145
        %2188 = vmatprep.subr.mxu0 0.0
        %2189 = vmatpush1.msra.mxu0 %v2146
        %2190 = vmatprep.subr.mxu0 0.0
        %2191 = vmatpush1.msra.mxu0 %v2147
        %2192 = vmatprep.subr.mxu0 0.0
        %2193 = vmatpush1.msra.mxu0 %v2148
        %2194 = vmatprep.subr.mxu0 0.0
        %2195 = vmatpush1.msra.mxu0 %v2149
        %2196 = vmatprep.subr.mxu0 0.0
        %2197 = vmatpush1.msra.mxu0 %v2150
        %2198 = vmatprep.subr.mxu0 0.0
        %2199 = vmatpush1.msra.mxu0 %v2151
        %2200 = vmatprep.subr.mxu0 0.0
        %2201 = vmatpush1.msra.mxu0 %v2152
        %2202 = vmatprep.subr.mxu0 0.0
        %2203 = vmatpush1.msra.mxu0 %v2153
        %2204 = vmatprep.subr.mxu0 0.0
        %2205 = vmatpush1.msra.mxu0 %v2154
        %2206 = vmatprep.subr.mxu0 0.0
        %2207 = vmatpush1.msra.mxu0 %v2155
        %2208 = vmatprep.subr.mxu0 0.0
        %2209 = vmatpush1.msra.mxu0 %v2156
        %2210 = vmatprep.subr.mxu0 0.0
        %2211 = vmatpush1.msra.mxu0 %v2157
        %2212 = vmatprep.subr.mxu0 0.0
        %2213 = vmatpush1.msra.mxu0 %v2158
        %2214 = vmatprep.subr.mxu0 0.0
        %2215 = vmatpush1.msra.mxu0 %v2159
        %2216 = vmatprep.subr.mxu0 0.0
        %2217 = vmatpush1.msra.mxu0 %v2160
        %2218 = vmatprep.subr.mxu0 0.0
        %2219 = vmatpush1.msra.mxu0 %v2161
        %2220 = vmatprep.subr.mxu0 0.0
        %2221 = vmatpush1.msra.mxu0 %v2162
        %2222 = vmatprep.subr.mxu0 0.0
        %2223 = vmatpush1.msra.mxu0 %v2163
        %2224 = vmatprep.subr.mxu0 0.0
        %2225 = vmatpush1.msra.mxu0 %v2164
        %2226 = vmatprep.subr.mxu0 0.0
        %2227 = vmatpush1.msra.mxu0 %v2165
        %2228 = vmatprep.subr.mxu0 0.0
        %2229 = vmatpush1.msra.mxu0 %v2166
        %2230 = vmatprep.subr.mxu0 0.0
        %2231 = vmatpush1.msra.mxu0 %v2167
        %2232 = vmatprep.subr.mxu0 0.0
        %2233 = vmatpush1.msra.mxu0 %v2168
        %2234 = vmatprep.subr.mxu0 0.0
        %2235 = vmatpush1.msra.mxu0 %v2169
        %2236 = vmatprep.subr.mxu0 0.0
        %2237 = vmatpush1.msra.mxu0 %v2170
        %2238 = vmatprep.subr.mxu0 0.0
        %2239 = vmatpush1.msra.mxu0 %v2171
        %2240 = vmatprep.mubr.f32.mxu0 %v2174
        %2241 = vmatmul.mubr.f32.gmra.mrb[0].mxu0 %v1945
        %v2242 = vpop.f32.mrb[0].mxu0
        %v2243 = vadd.f32 0.0, %v2242
        %v2244 = vpop.f32.mrb[0].mxu0
        %2245 = vdwg.mxu0
        %v2246 = vadd.f32 %v2172, %v2243
        %2247 = vst [vmem:[%s615] sm:$0x7] %v2246
        %p2248 = scmp.lt.s32.totalorder %s26, 1
        %s2249 = scalar_select %p2248, %s26, 1
        %s2250 = smul.addr %s2249, 4
        %s2251 = scalar_lea.vmem %s11, %s2250
        // Predicated region
        $region115: #{tpu_custom_call.1} parent=101 // pred_check
          %p2252 = pneg %p325
        $region116: #{tpu_custom_call.1} parent=101 // pred_check_branch
          %2254 = sbr.rel (%p2252) target = $region118
        $region117: #{tpu_custom_call.1} parent=101 // pred_region
          _
        $region118: #{tpu_custom_call.1} parent=101 // pred_fallthru
          _
      $region102: #{tpu_custom_call.1} parent=5 // pred_fallthru
        _
      %p2255 = scmp.le.s32.totalorder 2, %s17
      // Predicated region
      $region119: #{tpu_custom_call.1} parent=5 // pred_check
        %p2256 = pneg %p2255
      $region120: #{tpu_custom_call.1} parent=5 // pred_check_branch
        %2258 = sbr.rel (%p2256) target = $region122
      $region121: #{tpu_custom_call.1} parent=5 // pred_region
        %s2259 = ssub.s32 %s17, 2
        // Predicated region
        $region123: #{tpu_custom_call.1} parent=121 // pred_check
          %p2260 = pneg %p331
        $region124: #{tpu_custom_call.1} parent=121 // pred_check_branch
          %2262 = sbr.rel (%p2260) target = $region126
        $region125: #{tpu_custom_call.1} parent=121 // pred_region
          %p2263 = scmp.lt.s32.totalorder %s28, 1
          %s2264 = scalar_select %p2263, %s28, 1
          %s2265 = smul.addr %s2264, 4
          %s2266 = scalar_lea.vmem %s11, %s2265
        $region126: #{tpu_custom_call.1} parent=121 // pred_fallthru
          _
      $region122: #{tpu_custom_call.1} parent=5 // pred_fallthru
        _
    $region6: #{tpu_custom_call.1} parent=1 // loop_footer
      %s21 = sadd.s32 1, %s17
    $region7: #{tpu_custom_call.1} parent=1 // loop_footer_branch
      %16 = sbr.rel target = $region3
    $region8: #{tpu_custom_call.1} parent=1 // loop_exit
      _

</llo_original>
